<compile_context>
chip_gen: v5e
topology: v5e:2x2
jax: 0.10.0
libtpu: 0.0.40
codegen_flags: <defaults>
</compile_context>

<pallas_src>
import functools

import jax
import jax.numpy as jnp
import numpy as np
from jax.experimental import pallas as pl
from jax.experimental.pallas import tpu as pltpu


# ---------------------------------------------------------------------------
# Pallas kernel: fake-quant(tile) -> in-VMEM im2col -> single bf16 MXU dot
#                -> scale + bias + ReLU
# ---------------------------------------------------------------------------
def _qconv_kernel(scales_ref, x_ref, w_ref, b_ref, o_ref, q_ref, col_ref, *,
                  kh, kw, w_p, cin_pad, tm, tin):
    """One (image, row-tile) grid step.

    scales_ref: (2,)              f32 SMEM  [scale, 1/scale]
    x_ref:      (r, cin_pad)      f32 VMEM  whole padded image, spatially flattened
    w_ref:      (kh*kw*cin_pad, cout) bf16 VMEM  K-concatenated weights
    b_ref:      (1, cout)         f32 VMEM
    o_ref:      (tm, cout)        f32 VMEM  output rows of this tile
    q_ref:      (tin, cin_pad)    bf16 VMEM scratch (quantized tile + halo)
    col_ref:    (tm, kh*kw*cin_pad) bf16 VMEM scratch (im2col LHS)
    """
    s = scales_ref[0]
    inv_s = scales_ref[1]

    t = pl.program_id(1)
    start = t * tm
    if tm % 8 == 0:
        start = pl.multiple_of(start, 8)

    # FakeQuantize ONCE per tile on the non-expanded (tin, cin_pad) halo slice.
    # Values are exact integers in [-127, 127] -> the bf16 cast is lossless.
    x_slice = x_ref[pl.ds(start, tin), :]
    q_ref[...] = jnp.clip(jnp.round(x_slice * inv_s), -127.0, 127.0).astype(q_ref.dtype)

    # In-kernel im2col: 9 shifted VMEM copies build the (tm, kh*kw*cin_pad) LHS.
    # Every column of col_ref is (re)written each step -> no stale scratch reads.
    for dy in range(kh):
        for dx in range(kw):
            tap = dy * kw + dx
            off = dy * w_p + dx                       # static shift in flattened rows
            col_ref[:, tap * cin_pad:(tap + 1) * cin_pad] = q_ref[pl.ds(off, tm), :]

    # Single K = kh*kw*cin_pad bf16 x bf16 MXU matmul with f32 accumulation:
    # no per-tap MXU invocations, no vreg-resident f32 accumulator (no spills).
    acc = jnp.dot(col_ref[...], w_ref[...], preferred_element_type=jnp.float32)

    # Per-tensor scale factored out of the matmul; bias; ReLU.
    # DeQuantStub on an already-float tensor is the identity.
    o_ref[...] = jnp.maximum(s * acc + b_ref[...], 0.0)


# ---------------------------------------------------------------------------
# Wrapper: layout prep (NCHW -> padded flattened NHWC), qparams, pallas_call
# ---------------------------------------------------------------------------
def quantized_model_forward(x_nchw, w_oihw, b, *, pad=1, rows_per_tile_target=8,
                            scale=None):
    """x_nchw: (N, Cin, H, W) float32.  Returns (N, Cout, H, W) float32."""
    n, cin, h, w = x_nchw.shape
    cout, cin_w, kh, kw = w_oihw.shape
    assert cin_w == cin

    cin_pad = ((cin + 7) // 8) * 8            # sublane-aligned contraction feed
    w_p = w + 2 * pad                         # padded row length (flattened stride)
    m_out = h * w_p                           # conv evaluated on (h, w_p); extra
    halo = (kh - 1) * w_p + (kw - 1)          # columns (12.5% at W=16) are discarded

    # Row tiling: largest divisor of H <= target whose flattened tile is sublane
    # aligned; fall back to a single full-image tile (full-dim block is always legal).
    rows_per_tile = h
    for d in range(min(h, rows_per_tile_target), 0, -1):
        if h % d == 0 and (d * w_p) % 8 == 0:
            rows_per_tile = d
            break
    n_tiles = h // rows_per_tile
    tm = rows_per_tile * w_p                  # flattened output rows per tile
    tin = ((tm + halo + 7) // 8) * 8          # tile input window (sublane-rounded)

    # Flattened-input rows the last tile needs; add bottom spatial pad rows to cover.
    r_need = (n_tiles - 1) * tm + tin
    base = (h + 2 * pad) * w_p
    deficit = max(0, r_need - base)
    extra_rows = -(-deficit // w_p)           # ceil-div
    r = base + extra_rows * w_p
    assert r >= r_need

    # ---- observer / qparams (QuantStub): per-tensor symmetric int8 scale + 1/scale --
    if scale is None:
        max_abs = jnp.maximum(jnp.max(jnp.abs(x_nchw)), 1e-8)
        scale = (max_abs / 127.0).astype(jnp.float32)
    scales = jnp.stack([scale, 1.0 / scale]).astype(jnp.float32)          # (2,)

    # ---- layout glue: NCHW -> NHWC, ONE combined pad, flatten spatial -------------
    x_nhwc = jnp.transpose(x_nchw, (0, 2, 3, 1)).astype(jnp.float32)
    x_pd = jnp.pad(x_nhwc, ((0, 0), (pad, pad + extra_rows), (pad, pad),
                            (0, cin_pad - cin)))
    x_flat = x_pd.reshape(n, r, cin_pad)

    # weights (Cout, Cin, KH, KW) -> one K-concatenated (KH*KW*Cin_pad, Cout) bf16 RHS
    k_cols = kh * kw * cin_pad
    w_t = jnp.transpose(w_oihw, (2, 3, 1, 0)).astype(jnp.float32)   # (KH,KW,Cin,Cout)
    w_t = jnp.pad(w_t, ((0, 0), (0, 0), (0, cin_pad - cin), (0, 0)))
    w_mat = w_t.reshape(k_cols, cout).astype(jnp.bfloat16)
    b_row = b.astype(jnp.float32).reshape(1, cout)

    kernel = functools.partial(_qconv_kernel, kh=kh, kw=kw, w_p=w_p,
                               cin_pad=cin_pad, tm=tm, tin=tin)

    out_flat = pl.pallas_call(
        kernel,
        out_shape=jax.ShapeDtypeStruct((n, m_out, cout), jnp.float32),
        grid=(n, n_tiles),
        in_specs=[
            pl.BlockSpec(memory_space=pltpu.SMEM),                       # scales (2,)
            pl.BlockSpec((None, r, cin_pad), lambda i, t: (i, 0, 0)),    # image i
            pl.BlockSpec((k_cols, cout), lambda i, t: (0, 0)),           # weights
            pl.BlockSpec((1, cout), lambda i, t: (0, 0)),                # bias
        ],
        out_specs=pl.BlockSpec((None, tm, cout), lambda i, t: (i, t, 0)),
        scratch_shapes=[
            pltpu.VMEM((tin, cin_pad), jnp.bfloat16),   # quantized tile + halo
            pltpu.VMEM((tm, k_cols), jnp.bfloat16),     # im2col LHS
        ],
        compiler_params=pltpu.CompilerParams(
            dimension_semantics=("parallel", "parallel"),
            vmem_limit_bytes=32 * 1024 * 1024),
    )(scales, x_flat, w_mat, b_row)

    # (N, H*W_p, Cout) -> NCHW, dropping the dead padded columns
    out = out_flat.reshape(n, h, w_p, cout)[:, :, :w, :]
    return jnp.transpose(out, (0, 3, 1, 2))


# ---------------------------------------------------------------------------
# Pure-JAX reference (same math, incl. the intentional bf16 weight cast)
# ---------------------------------------------------------------------------
def _reference(x_nchw, w_oihw, b):
    max_abs = jnp.maximum(jnp.max(jnp.abs(x_nchw)), 1e-8)
    s = (max_abs / 127.0).astype(jnp.float32)
    inv_s = 1.0 / s
    xq = jnp.clip(jnp.round(x_nchw * inv_s), -127.0, 127.0) * s
    # Kernel uses a bf16 weight path (exact-integer LHS, ~2^-8 weight rounding);
    # mirror that cast so the check isolates the kernel implementation.
    w_b = w_oihw.astype(jnp.bfloat16).astype(jnp.float32)
    y = jax.lax.conv_general_dilated(
        xq, w_b, window_strides=(1, 1), padding="SAME",
        dimension_numbers=("NCHW", "OIHW", "NCHW"),
        precision=jax.lax.Precision.HIGHEST)
    return jnp.maximum(y + b.reshape(1, -1, 1, 1), 0.0)


if __name__ == "__main__":
    # small shapes consistent with the conv model: batch=2, Cin=4, H=W=16, Cout=8
    key = jax.random.PRNGKey(0)
    kx, kw_, kb = jax.random.split(key, 3)

    N, CIN, H, W, COUT = 2, 4, 16, 16, 8
    x = jax.random.normal(kx, (N, CIN, H, W), dtype=jnp.float32)

    # deterministic parameter init (PyTorch Conv2d weight shape: (Cout, Cin, 3, 3))
    fan_in = CIN * 3 * 3
    bound = 1.0 / np.sqrt(fan_in)
    w = jax.random.uniform(kw_, (COUT, CIN, 3, 3), jnp.float32, -bound, bound)
    b = jax.random.uniform(kb, (COUT,), jnp.float32, -bound, bound)

    out = jax.block_until_ready(quantized_model_forward(x, w, b))
    ref = jax.block_until_ready(_reference(x, w, b))

    assert out.shape == (N, COUT, H, W), out.shape
    np.testing.assert_allclose(np.asarray(out), np.asarray(ref), rtol=2e-4, atol=2e-4)

    print("KERNEL_OK")
</pallas_src>

<mosaic_0001>
module attributes {stable_mosaic.version = 11 : i64} {
  func.func @_qconv_kernel(%arg0: i32, %arg1: i32, %arg2: memref<2xf32, #tpu.memory_space<smem>>, %arg3: memref<1x342x8xf32, #tpu.memory_space<vmem>>, %arg4: memref<72x8xbf16, #tpu.memory_space<vmem>>, %arg5: memref<1x8xf32, #tpu.memory_space<vmem>>, %arg6: memref<1x144x8xf32, #tpu.memory_space<vmem>>, %arg7: memref<184x8xbf16, #tpu.memory_space<vmem>>, %arg8: memref<144x72xbf16, #tpu.memory_space<vmem>>) attributes {dimension_semantics = [#tpu.dimension_semantics<parallel>, #tpu.dimension_semantics<parallel>], iteration_bounds = array<i64: 2, 2>, scalar_prefetch = 0 : i64, scratch_operands = 2 : i64, tpu.core_type = #tpu.core_type<tc>, window_params = [{transform_indices = @transform_0, window_bounds = array<i64: 2>}, {transform_indices = @transform_1, window_bounds = array<i64: 1, 342, 8>}, {pipeline_mode = #tpu.pipeline_mode<synchronous>, transform_indices = @transform_2, window_bounds = array<i64: 72, 8>}, {pipeline_mode = #tpu.pipeline_mode<synchronous>, transform_indices = @transform_3, window_bounds = array<i64: 1, 8>}, {transform_indices = @transform_4, window_bounds = array<i64: 1, 144, 8>}]} {
    %c0 = arith.constant 0 : index
    %0 = memref.load %arg2[%c0] : memref<2xf32, #tpu.memory_space<smem>>
    %c1 = arith.constant 1 : index
    %1 = memref.load %arg2[%c1] : memref<2xf32, #tpu.memory_space<smem>>
    %c144_i32 = arith.constant 144 : i32
    %2 = arith.muli %arg1, %c144_i32 : i32
    %3 = tpu.assume_multiple %2, 8 : i32
    %c0_0 = arith.constant 0 : index
    %4 = arith.index_cast %3 : i32 to index
    %c0_1 = arith.constant 0 : index
    %5 = vector.load %arg3[%c0_0, %4, %c0_1] : memref<1x342x8xf32, #tpu.memory_space<vmem>>, vector<1x184x8xf32>
    %6 = vector.shape_cast %5 : vector<1x184x8xf32> to vector<184x8xf32>
    %7 = vector.broadcast %1 : f32 to vector<184x8xf32>
    %8 = arith.mulf %6, %7 : vector<184x8xf32>
    %9 = math.roundeven %8 : vector<184x8xf32>
    %cst = arith.constant -1.270000e+02 : f32
    %cst_2 = arith.constant 1.270000e+02 : f32
    %10 = vector.broadcast %cst : f32 to vector<184x8xf32>
    %11 = arith.maximumf %10, %9 : vector<184x8xf32>
    %12 = vector.broadcast %cst_2 : f32 to vector<184x8xf32>
    %13 = arith.minimumf %12, %11 : vector<184x8xf32>
    %14 = arith.truncf %13 : vector<184x8xf32> to vector<184x8xbf16>
    %c0_3 = arith.constant 0 : index
    %c0_4 = arith.constant 0 : index
    %15 = vector.load %arg7[%c0_3, %c0_4] : memref<184x8xbf16, #tpu.memory_space<vmem>>, vector<184x8xbf16>
    tpu.vector_store %arg7[%c0_3, %c0_4], %14 {strides = array<i32>} : memref<184x8xbf16, #tpu.memory_space<vmem>>, vector<184x8xbf16>,
    %c0_5 = arith.constant 0 : index
    %c0_6 = arith.constant 0 : index
    %16 = vector.load %arg7[%c0_5, %c0_6] : memref<184x8xbf16, #tpu.memory_space<vmem>>, vector<144x8xbf16>
    %c0_7 = arith.constant 0 : index
    %c0_8 = arith.constant 0 : index
    %17 = vector.load %arg8[%c0_7, %c0_8] : memref<144x72xbf16, #tpu.memory_space<vmem>>, vector<144x8xbf16>
    tpu.vector_store %arg8[%c0_7, %c0_8], %16 {strides = array<i32>} : memref<144x72xbf16, #tpu.memory_space<vmem>>, vector<144x8xbf16>,
    %c1_9 = arith.constant 1 : index
    %c0_10 = arith.constant 0 : index
    %18 = vector.load %arg7[%c1_9, %c0_10] : memref<184x8xbf16, #tpu.memory_space<vmem>>, vector<144x8xbf16>
    %c0_11 = arith.constant 0 : index
    %c8 = arith.constant 8 : index
    %19 = vector.load %arg8[%c0_11, %c8] : memref<144x72xbf16, #tpu.memory_space<vmem>>, vector<144x8xbf16>
    tpu.vector_store %arg8[%c0_11, %c8], %18 {strides = array<i32>} : memref<144x72xbf16, #tpu.memory_space<vmem>>, vector<144x8xbf16>,
    %c2 = arith.constant 2 : index
    %c0_12 = arith.constant 0 : index
    %20 = vector.load %arg7[%c2, %c0_12] : memref<184x8xbf16, #tpu.memory_space<vmem>>, vector<144x8xbf16>
    %c0_13 = arith.constant 0 : index
    %c16 = arith.constant 16 : index
    %21 = vector.load %arg8[%c0_13, %c16] : memref<144x72xbf16, #tpu.memory_space<vmem>>, vector<144x8xbf16>
    tpu.vector_store %arg8[%c0_13, %c16], %20 {strides = array<i32>} : memref<144x72xbf16, #tpu.memory_space<vmem>>, vector<144x8xbf16>,
    %c18 = arith.constant 18 : index
    %c0_14 = arith.constant 0 : index
    %22 = vector.load %arg7[%c18, %c0_14] : memref<184x8xbf16, #tpu.memory_space<vmem>>, vector<144x8xbf16>
    %c0_15 = arith.constant 0 : index
    %c24 = arith.constant 24 : index
    %23 = vector.load %arg8[%c0_15, %c24] : memref<144x72xbf16, #tpu.memory_space<vmem>>, vector<144x8xbf16>
    tpu.vector_store %arg8[%c0_15, %c24], %22 {strides = array<i32>} : memref<144x72xbf16, #tpu.memory_space<vmem>>, vector<144x8xbf16>,
    %c19 = arith.constant 19 : index
    %c0_16 = arith.constant 0 : index
    %24 = vector.load %arg7[%c19, %c0_16] : memref<184x8xbf16, #tpu.memory_space<vmem>>, vector<144x8xbf16>
    %c0_17 = arith.constant 0 : index
    %c32 = arith.constant 32 : index
    %25 = vector.load %arg8[%c0_17, %c32] : memref<144x72xbf16, #tpu.memory_space<vmem>>, vector<144x8xbf16>
    tpu.vector_store %arg8[%c0_17, %c32], %24 {strides = array<i32>} : memref<144x72xbf16, #tpu.memory_space<vmem>>, vector<144x8xbf16>,
    %c20 = arith.constant 20 : index
    %c0_18 = arith.constant 0 : index
    %26 = vector.load %arg7[%c20, %c0_18] : memref<184x8xbf16, #tpu.memory_space<vmem>>, vector<144x8xbf16>
    %c0_19 = arith.constant 0 : index
    %c40 = arith.constant 40 : index
    %27 = vector.load %arg8[%c0_19, %c40] : memref<144x72xbf16, #tpu.memory_space<vmem>>, vector<144x8xbf16>
    tpu.vector_store %arg8[%c0_19, %c40], %26 {strides = array<i32>} : memref<144x72xbf16, #tpu.memory_space<vmem>>, vector<144x8xbf16>,
    %c36 = arith.constant 36 : index
    %c0_20 = arith.constant 0 : index
    %28 = vector.load %arg7[%c36, %c0_20] : memref<184x8xbf16, #tpu.memory_space<vmem>>, vector<144x8xbf16>
    %c0_21 = arith.constant 0 : index
    %c48 = arith.constant 48 : index
    %29 = vector.load %arg8[%c0_21, %c48] : memref<144x72xbf16, #tpu.memory_space<vmem>>, vector<144x8xbf16>
    tpu.vector_store %arg8[%c0_21, %c48], %28 {strides = array<i32>} : memref<144x72xbf16, #tpu.memory_space<vmem>>, vector<144x8xbf16>,
    %c37 = arith.constant 37 : index
    %c0_22 = arith.constant 0 : index
    %30 = vector.load %arg7[%c37, %c0_22] : memref<184x8xbf16, #tpu.memory_space<vmem>>, vector<144x8xbf16>
    %c0_23 = arith.constant 0 : index
    %c56 = arith.constant 56 : index
    %31 = vector.load %arg8[%c0_23, %c56] : memref<144x72xbf16, #tpu.memory_space<vmem>>, vector<144x8xbf16>
    tpu.vector_store %arg8[%c0_23, %c56], %30 {strides = array<i32>} : memref<144x72xbf16, #tpu.memory_space<vmem>>, vector<144x8xbf16>,
    %c38 = arith.constant 38 : index
    %c0_24 = arith.constant 0 : index
    %32 = vector.load %arg7[%c38, %c0_24] : memref<184x8xbf16, #tpu.memory_space<vmem>>, vector<144x8xbf16>
    %c0_25 = arith.constant 0 : index
    %c64 = arith.constant 64 : index
    %33 = vector.load %arg8[%c0_25, %c64] : memref<144x72xbf16, #tpu.memory_space<vmem>>, vector<144x8xbf16>
    tpu.vector_store %arg8[%c0_25, %c64], %32 {strides = array<i32>} : memref<144x72xbf16, #tpu.memory_space<vmem>>, vector<144x8xbf16>,
    %c0_26 = arith.constant 0 : index
    %c0_27 = arith.constant 0 : index
    %34 = vector.load %arg8[%c0_26, %c0_27] : memref<144x72xbf16, #tpu.memory_space<vmem>>, vector<144x72xbf16>
    %c0_28 = arith.constant 0 : index
    %c0_29 = arith.constant 0 : index
    %35 = vector.load %arg4[%c0_28, %c0_29] : memref<72x8xbf16, #tpu.memory_space<vmem>>, vector<72x8xbf16>
    %cst_30 = arith.constant dense<0.000000e+00> : vector<144x8xf32>
    %36 = tpu.matmul %34, %35, %cst_30 {dimension_numbers = #tpu.dot_dimension_numbers<[1], [0], [0], [1], [0, 0, 1, 1], [], []>} : vector<144x72xbf16>, vector<72x8xbf16>, vector<144x8xf32> -> vector<144x8xf32>
    %37 = vector.broadcast %0 : f32 to vector<144x8xf32>
    %38 = arith.mulf %37, %36 : vector<144x8xf32>
    %c0_31 = arith.constant 0 : index
    %c0_32 = arith.constant 0 : index
    %39 = vector.load %arg5[%c0_31, %c0_32] : memref<1x8xf32, #tpu.memory_space<vmem>>, vector<1x8xf32>
    %40 = vector.broadcast %39 : vector<1x8xf32> to vector<144x8xf32>
    %41 = arith.addf %38, %40 : vector<144x8xf32>
    %cst_33 = arith.constant 0.000000e+00 : f32
    %42 = vector.broadcast %cst_33 : f32 to vector<144x8xf32>
    %43 = arith.maximumf %41, %42 : vector<144x8xf32>
    %c0_34 = arith.constant 0 : index
    %c0_35 = arith.constant 0 : index
    %c0_36 = arith.constant 0 : index
    %44 = vector.load %arg6[%c0_34, %c0_35, %c0_36] : memref<1x144x8xf32, #tpu.memory_space<vmem>>, vector<1x144x8xf32>
    %45 = vector.shape_cast %44 : vector<1x144x8xf32> to vector<144x8xf32>
    %46 = vector.shape_cast %43 : vector<144x8xf32> to vector<1x144x8xf32>
    tpu.vector_store %arg6[%c0_34, %c0_35, %c0_36], %46 {strides = array<i32>} : memref<1x144x8xf32, #tpu.memory_space<vmem>>, vector<1x144x8xf32>,
    return
  }
  func.func @transform_0(%arg0: i32, %arg1: i32) -> i32 {
    %c0_i32 = arith.constant 0 : i32
    %c0_i32_0 = arith.constant 0 : i32
    return %c0_i32 : i32
  }
  func.func @transform_1(%arg0: i32, %arg1: i32) -> (i32, i32, i32) {
    %c0_i32 = arith.constant 0 : i32
    %c0_i32_0 = arith.constant 0 : i32
    %c0_i32_1 = arith.constant 0 : i32
    return %arg0, %c0_i32, %c0_i32_0 : i32, i32, i32
  }
  func.func @transform_2(%arg0: i32, %arg1: i32) -> (i32, i32) {
    %c0_i32 = arith.constant 0 : i32
    %c0_i32_0 = arith.constant 0 : i32
    %c0_i32_1 = arith.constant 0 : i32
    return %c0_i32, %c0_i32_0 : i32, i32
  }
  func.func @transform_3(%arg0: i32, %arg1: i32) -> (i32, i32) {
    %c0_i32 = arith.constant 0 : i32
    %c0_i32_0 = arith.constant 0 : i32
    %c0_i32_1 = arith.constant 0 : i32
    return %c0_i32, %c0_i32_0 : i32, i32
  }
  func.func @transform_4(%arg0: i32, %arg1: i32) -> (i32, i32, i32) {
    %c0_i32 = arith.constant 0 : i32
    %c0_i32_0 = arith.constant 0 : i32
    return %arg0, %arg1, %c0_i32 : i32, i32, i32
  }
}

</mosaic_0001>

<llo_original>
// kernel: tpu_custom_call.1
$region0: #{tpu_custom_call.1}
  #allocation0 [shape = 'u32[]', space=smem, size = 0x4, offset = 0x4, fixed_abs, tag = 'smem constant byte address 0x4 - core index']
  #allocation1 [shape = 'u32[72,128]{1,0:T(1,128)}', space=vmem, size = 0x9000, scoped, tag = 'internal scratch']
  #allocation2 [shape = 'bf16[184,8]{1,0:T(8,128)(2,1)}', space=vmem, size = 0xb800, scoped, tag = 'scratch operand']
  #allocation3 [shape = 'bf16[144,72]{1,0:T(8,128)(2,1)}', space=vmem, size = 0x9000, scoped, tag = 'scratch operand']
  %s0 = inlined_call_operand.vmem [shape: f32[2], index: 0, kind: input, shape index: {}]
  %s1 = inlined_call_operand.vmem [shape: f32[2,342,8], index: 1, kind: input, shape index: {}]
  %s2 = inlined_call_operand.vmem [shape: bf16[72,8], index: 2, kind: input, shape index: {}]
  %s3 = inlined_call_operand.vmem [shape: f32[1,8], index: 3, kind: input, shape index: {}]
  %s4 = inlined_call_operand.vmem [shape: f32[2,288,8], index: 4, kind: output, shape index: {}]
  %s5 = sld [smem:[#allocation0]]
  $region53: #{tpu_custom_call.1} parent=0
    _
  %s7 = ssub.s32 1, %s5
  %s8 = scalar_select 0, %s7, %s5
  $region1: #{tpu_custom_call.1} parent=0
    #allocation4 [shape = 'u8[512]{0}', space=smem, size = 0x200, scoped, tag = 'input window, operand 0, single buffered']
    #allocation5 [shape = 's32[2]{0}', space=sflag, size = 0x8, scoped, tag = 'scoped memory for tpu_custom_call.1']
    %9 = vsyncpa [#allocation5], 0
    loop: start=0, step=1, limit=6
    $region2: #{tpu_custom_call.1} parent=1 // loop_pre_header
      _
    $region3: #{tpu_custom_call.1} parent=1 // loop_header
      %s11 = sphi 0, %s15
      %p12 = scmp.ge.s32.totalorder %s11, 6
      %s18 = sphi 0, %s30
      %s19 = sphi 0, %s26
      %s20 = sphi 0, %s18
      %s21 = sphi 0, %s19
      %s22 = sphi 0, %s20
      %s23 = sphi 0, %s21
      %s31 = sphi 0, %s31
      %s33 = sphi 0, %s31
      %s34 = sphi 0, %s33
      %s48 = sphi 0, %s34
      %s54 = sphi 0, %s56
      %s57 = sphi 0, %s54
      %s58 = sphi 0, %s57
      %s74 = sphi 0, %s58
      %s78 = sphi 0, %s78
      %s80 = sphi 0, %s78
      %s81 = sphi 0, %s80
      %s95 = sphi 0, %s81
      %s99 = sphi 0, %s99
      %s101 = sphi 0, %s99
      %s102 = sphi 0, %s101
      %s116 = sphi 0, %s102
      %s124 = sphi 0, %s126
      %s127 = sphi 0, %s124
      %s128 = sphi 0, %s127
      %s144 = sphi 0, %s128
    $region4: #{tpu_custom_call.1} parent=1 // loop_header_branch
      %14 = sbr.rel (%p12) target = $region8
    $region5: #{tpu_custom_call.1} parent=1 // loop_body
      %s16 = ssub.s32 %s11, 1
      %s17 = ssub.s32 %s11, 2
      %s24 = sadd.s32 1, %s19
      %p25 = scmp.ge.s32.totalorder %s24, 2
      %s26 = scalar_select %p25, 0, %s24
      %s27 = sadd.s32 1, %s18
      %s28 = scalar_select %p25, %s27, %s18
      %p29 = scmp.ge.s32.totalorder %s28, 2
      %s30 = scalar_select %p29, 0, %s28
      %s32 = sadd.s32 %s31, 1
      %p35 = scmp.eq.s32.totalorder %s11, 3
      %p36 = scmp.ne.s32.totalorder %s31, %s33
      %p37 = scmp.eq.s32.totalorder %s11, 0
      %p38 = por %p36, %p37
      %p39 = scmp.ne.s32.totalorder %s31, %s33
      %p40 = scmp.eq.s32.totalorder %s16, 3
      %p41 = por %p39, %p40
      %p42 = scmp.ne.s32.totalorder %s33, %s34
      %p43 = scmp.eq.s32.totalorder %s16, 0
      %p44 = por %p42, %p43
      %p45 = scmp.ne.s32.totalorder %s33, %s34
      %p46 = scmp.eq.s32.totalorder %s17, 3
      %p47 = por %p45, %p46
      %p49 = scmp.ne.s32.totalorder %s34, %s48
      %p50 = scmp.eq.s32.totalorder %s17, 0
      %p51 = por %p49, %p50
      %s52 = ssub.s32 %s18, %s30
      %p53 = scmp.eq.s32.totalorder %s52, 0
      %s55 = sadd.s32 %s54, 1
      %s56 = scalar_select %p53, %s54, %s55
      %p59 = pneg %p53
      %p60 = scmp.eq.s32.totalorder %s11, 3
      %p61 = por %p59, %p60
      %p62 = scmp.ne.s32.totalorder %s54, %s57
      %p63 = scmp.eq.s32.totalorder %s11, 0
      %p64 = por %p62, %p63
      %p65 = scmp.ne.s32.totalorder %s54, %s57
      %p66 = scmp.eq.s32.totalorder %s16, 3
      %p67 = por %p65, %p66
      %p68 = scmp.ne.s32.totalorder %s57, %s58
      %p69 = scmp.eq.s32.totalorder %s16, 0
      %p70 = por %p68, %p69
      %p71 = scmp.ne.s32.totalorder %s57, %s58
      %p72 = scmp.eq.s32.totalorder %s17, 3
      %p73 = por %p71, %p72
      %p75 = scmp.ne.s32.totalorder %s58, %s74
      %p76 = scmp.eq.s32.totalorder %s17, 0
      %p77 = por %p75, %p76
      %s79 = sadd.s32 %s78, 1
      %p82 = scmp.eq.s32.totalorder %s11, 3
      %p83 = scmp.ne.s32.totalorder %s78, %s80
      %p84 = scmp.eq.s32.totalorder %s11, 0
      %p85 = por %p83, %p84
      %p86 = scmp.ne.s32.totalorder %s78, %s80
      %p87 = scmp.eq.s32.totalorder %s16, 3
      %p88 = por %p86, %p87
      %p89 = scmp.ne.s32.totalorder %s80, %s81
      %p90 = scmp.eq.s32.totalorder %s16, 0
      %p91 = por %p89, %p90
      %p92 = scmp.ne.s32.totalorder %s80, %s81
      %p93 = scmp.eq.s32.totalorder %s17, 3
      %p94 = por %p92, %p93
      %p96 = scmp.ne.s32.totalorder %s81, %s95
      %p97 = scmp.eq.s32.totalorder %s17, 0
      %p98 = por %p96, %p97
      %s100 = sadd.s32 %s99, 1
      %p103 = scmp.eq.s32.totalorder %s11, 3
      %p104 = scmp.ne.s32.totalorder %s99, %s101
      %p105 = scmp.eq.s32.totalorder %s11, 0
      %p106 = por %p104, %p105
      %p107 = scmp.ne.s32.totalorder %s99, %s101
      %p108 = scmp.eq.s32.totalorder %s16, 3
      %p109 = por %p107, %p108
      %p110 = scmp.ne.s32.totalorder %s101, %s102
      %p111 = scmp.eq.s32.totalorder %s16, 0
      %p112 = por %p110, %p111
      %p113 = scmp.ne.s32.totalorder %s101, %s102
      %p114 = scmp.eq.s32.totalorder %s17, 3
      %p115 = por %p113, %p114
      %p117 = scmp.ne.s32.totalorder %s102, %s116
      %p118 = scmp.eq.s32.totalorder %s17, 0
      %p119 = por %p117, %p118
      %s120 = ssub.s32 %s18, %s30
      %s121 = ssub.s32 %s19, %s26
      %s122 = sor.u32 %s120, %s121
      %p123 = scmp.eq.s32.totalorder %s122, 0
      %s125 = sadd.s32 %s124, 1
      %s126 = scalar_select %p123, %s124, %s125
      %p129 = pneg %p123
      %p130 = scmp.eq.s32.totalorder %s11, 3
      %p131 = por %p129, %p130
      %p132 = scmp.ne.s32.totalorder %s124, %s127
      %p133 = scmp.eq.s32.totalorder %s11, 0
      %p134 = por %p132, %p133
      %p135 = scmp.ne.s32.totalorder %s124, %s127
      %p136 = scmp.eq.s32.totalorder %s16, 3
      %p137 = por %p135, %p136
      %p138 = scmp.ne.s32.totalorder %s127, %s128
      %p139 = scmp.eq.s32.totalorder %s16, 0
      %p140 = por %p138, %p139
      %p141 = scmp.ne.s32.totalorder %s127, %s128
      %p142 = scmp.eq.s32.totalorder %s17, 3
      %p143 = por %p141, %p142
      %p145 = scmp.ne.s32.totalorder %s128, %s144
      %p146 = scmp.eq.s32.totalorder %s17, 0
      %p147 = por %p145, %p146
      %p148 = scmp.le.s32.totalorder 1, %s11
      %p149 = scmp.lt.s32.totalorder %s11, 5
      %p150 = pnand %p148, %p149
      %p151 = pneg %p150
      // Predicated region
      $region9: #{tpu_custom_call.1} parent=5 // pred_check
        _
      $region10: #{tpu_custom_call.1} parent=5 // pred_check_branch
        %153 = sbr.rel (%p150) target = $region12
      $region11: #{tpu_custom_call.1} parent=5 // pred_region
        %s154 = ssub.s32 %s11, 1
        // Predicated region
        $region13: #{tpu_custom_call.1} parent=11 // pred_check
          %p155 = pneg %p44
        $region14: #{tpu_custom_call.1} parent=11 // pred_check_branch
          %157 = sbr.rel (%p155) target = $region16
        $region15: #{tpu_custom_call.1} parent=11 // pred_region
          %159 = vsyncadd [#allocation5], 0
          %s161 = sshll.u32 %s0, 4
          %s162 = int_to_ptr.vmem [resolvable:$true] %s161
          %164 = dma.vmem_to_smem %s162, 16, [#allocation4], [#allocation5]
        $region16: #{tpu_custom_call.1} parent=11 // pred_fallthru
          _
        // Predicated region
        $region17: #{tpu_custom_call.1} parent=11 // pred_check
          %p165 = pneg %p91
        $region18: #{tpu_custom_call.1} parent=11 // pred_check_branch
          %167 = sbr.rel (%p165) target = $region20
        $region19: #{tpu_custom_call.1} parent=11 // pred_region
          _
        $region20: #{tpu_custom_call.1} parent=11 // pred_fallthru
          _
        // Predicated region
        $region21: #{tpu_custom_call.1} parent=11 // pred_check
          %p168 = pneg %p112
        $region22: #{tpu_custom_call.1} parent=11 // pred_check_branch
          %170 = sbr.rel (%p168) target = $region24
        $region23: #{tpu_custom_call.1} parent=11 // pred_region
          _
        $region24: #{tpu_custom_call.1} parent=11 // pred_fallthru
          _
      $region12: #{tpu_custom_call.1} parent=5 // pred_fallthru
        _
      %p171 = scmp.lt.s32.totalorder %s11, 4
      // Predicated region
      $region25: #{tpu_custom_call.1} parent=5 // pred_check
        %p172 = pneg %p171
      $region26: #{tpu_custom_call.1} parent=5 // pred_check_branch
        %174 = sbr.rel (%p172) target = $region28
      $region27: #{tpu_custom_call.1} parent=5 // pred_region
        // Predicated region
        $region29: #{tpu_custom_call.1} parent=27 // pred_check
          %p175 = pneg %p64
        $region30: #{tpu_custom_call.1} parent=27 // pred_check_branch
          %177 = sbr.rel (%p175) target = $region32
        $region31: #{tpu_custom_call.1} parent=27 // pred_region
          %p178 = scmp.lt.s32.totalorder %s18, 1
          %s179 = scalar_select %p178, %s18, 1
          %s180 = smul.addr %s179, 43
          %s181 = smul.addr %s180, 8
          %s182 = scalar_lea.vmem %s1, %s181
        $region32: #{tpu_custom_call.1} parent=27 // pred_fallthru
          _
      $region28: #{tpu_custom_call.1} parent=5 // pred_fallthru
        _
      %p183 = scmp.le.s32.totalorder 1, %s11
      %p184 = scmp.lt.s32.totalorder %s11, 5
      %p185 = pnand %p183, %p184
      %p186 = pneg %p185
      // Predicated region
      $region33: #{tpu_custom_call.1} parent=5 // pred_check
        _
      $region34: #{tpu_custom_call.1} parent=5 // pred_check_branch
        %188 = sbr.rel (%p185) target = $region36
      $region35: #{tpu_custom_call.1} parent=5 // pred_region
        %s189 = ssub.s32 %s11, 1
        // Predicated region
        $region37: #{tpu_custom_call.1} parent=35 // pred_check
          %p190 = pneg %p44
        $region38: #{tpu_custom_call.1} parent=35 // pred_check_branch
          %192 = sbr.rel (%p190) target = $region40
        $region39: #{tpu_custom_call.1} parent=35 // pred_region
          %194 = dma.done [#allocation5], 16
        $region40: #{tpu_custom_call.1} parent=35 // pred_fallthru
          _
        %195 = sfence
        %p196 = pneg %p44
        %p197 = pneg %p41
        %p198 = scmp.lt.s32.totalorder %s20, 1
        %s199 = scalar_select %p198, %s20, 1
        %s200 = smul.addr %s199, 43
        %s201 = smul.addr %s200, 8
        %s202 = scalar_lea.vmem %s1, %s201
        %p203 = pneg %p70
        %p204 = pneg %p67
        %p205 = pneg %p91
        %p206 = pneg %p88
        %p207 = pneg %p112
        %p208 = pneg %p109
        %p209 = pneg %p140
        %p210 = pneg %p137
        %s211 = smul.u32 18, %s21
        %p212 = scmp.lt.s32.totalorder %s20, 1
        %s213 = scalar_select %p212, %s20, 1
        %p214 = scmp.lt.s32.totalorder %s211, 35
        %s215 = scalar_select %p214, %s211, 35
        %s216 = smul.addr %s213, 36
        %s217 = sadd.s32 %s215, %s216
        %s218 = smul.addr %s217, 8
        %s219 = scalar_lea.vmem %s4, %s218
        %p220 = scmp.lt.s32.totalorder %s20, 1
        %s221 = scalar_select %p220, %s20, 1
        %s222 = smul.addr %s221, 43
        %s223 = smul.addr %s222, 8
        %s224 = scalar_lea.vmem %s1, %s223
        %s225 = smul.u32 18, %s21
        %p226 = scmp.lt.s32.totalorder %s20, 1
        %s227 = scalar_select %p226, %s20, 1
        %p228 = scmp.lt.s32.totalorder %s225, 35
        %s229 = scalar_select %p228, %s225, 35
        %s230 = smul.addr %s227, 36
        %s231 = sadd.s32 %s229, %s230
        %s232 = smul.addr %s231, 8
        %s233 = scalar_lea.vmem %s4, %s232
        %s234 = smul.u32 18, %s21
        %s236 = sld [smem:[#allocation4]]
        %s237 = sld [smem:[#allocation4 + $0x1]]
        %s238 = smul.u32 %s21, 144
        %s239 = scalar_lea.vmem %s224, %s238
        %v240 = vld [vmem:[%s239] sm:$0xff]
        %v241 = vld [vmem:[%s239 + $0x8] sm:$0xff]
        %v242 = vld [vmem:[%s239 + $0x10] sm:$0xff]
        %v243 = vld [vmem:[%s239 + $0x18] sm:$0xff]
        %v244 = vld [vmem:[%s239 + $0x20] sm:$0xff]
        %v245 = vld [vmem:[%s239 + $0x28] sm:$0xff]
        %v246 = vld [vmem:[%s239 + $0x30] sm:$0xff]
        %v247 = vld [vmem:[%s239 + $0x38] sm:$0xff]
        %v248 = vld [vmem:[%s239 + $0x40] sm:$0xff]
        %v249 = vld [vmem:[%s239 + $0x48] sm:$0xff]
        %v250 = vld [vmem:[%s239 + $0x50] sm:$0xff]
        %v251 = vld [vmem:[%s239 + $0x58] sm:$0xff]
        %v252 = vld [vmem:[%s239 + $0x60] sm:$0xff]
        %v253 = vld [vmem:[%s239 + $0x68] sm:$0xff]
        %v254 = vld [vmem:[%s239 + $0x70] sm:$0xff]
        %v255 = vld [vmem:[%s239 + $0x78] sm:$0xff]
        %v256 = vld [vmem:[%s239 + $0x80] sm:$0xff]
        %v257 = vld [vmem:[%s239 + $0x88] sm:$0xff]
        %v258 = vld [vmem:[%s239 + $0x90] sm:$0xff]
        %v259 = vld [vmem:[%s239 + $0x98] sm:$0xff]
        %v260 = vld [vmem:[%s239 + $0xa0] sm:$0xff]
        %v261 = vld [vmem:[%s239 + $0xa8] sm:$0xff]
        %v262 = vld [vmem:[%s239 + $0xb0] sm:$0xff]
        %v263 = vstv %s237
        %v264 = vmul.f32 %v240, %v263
        %v265 = vmul.f32 %v241, %v263
        %v266 = vmul.f32 %v242, %v263
        %v267 = vmul.f32 %v243, %v263
        %v268 = vmul.f32 %v244, %v263
        %v269 = vmul.f32 %v245, %v263
        %v270 = vmul.f32 %v246, %v263
        %v271 = vmul.f32 %v247, %v263
        %v272 = vmul.f32 %v248, %v263
        %v273 = vmul.f32 %v249, %v263
        %v274 = vmul.f32 %v250, %v263
        %v275 = vmul.f32 %v251, %v263
        %v276 = vmul.f32 %v252, %v263
        %v277 = vmul.f32 %v253, %v263
        %v278 = vmul.f32 %v254, %v263
        %v279 = vmul.f32 %v255, %v263
        %v280 = vmul.f32 %v256, %v263
        %v281 = vmul.f32 %v257, %v263
        %v282 = vmul.f32 %v258, %v263
        %v283 = vmul.f32 %v259, %v263
        %v284 = vmul.f32 %v260, %v263
        %v285 = vmul.f32 %v261, %v263
        %v286 = vmul.f32 %v262, %v263
        %v287 = vround.ne.pseudo %v264
        %v288 = vround.ne.pseudo %v265
        %v289 = vround.ne.pseudo %v266
        %v290 = vround.ne.pseudo %v267
        %v291 = vround.ne.pseudo %v268
        %v292 = vround.ne.pseudo %v269
        %v293 = vround.ne.pseudo %v270
        %v294 = vround.ne.pseudo %v271
        %v295 = vround.ne.pseudo %v272
        %v296 = vround.ne.pseudo %v273
        %v297 = vround.ne.pseudo %v274
        %v298 = vround.ne.pseudo %v275
        %v299 = vround.ne.pseudo %v276
        %v300 = vround.ne.pseudo %v277
        %v301 = vround.ne.pseudo %v278
        %v302 = vround.ne.pseudo %v279
        %v303 = vround.ne.pseudo %v280
        %v304 = vround.ne.pseudo %v281
        %v305 = vround.ne.pseudo %v282
        %v306 = vround.ne.pseudo %v283
        %v307 = vround.ne.pseudo %v284
        %v308 = vround.ne.pseudo %v285
        %v309 = vround.ne.pseudo %v286
        %v310 = vmax.f32 %v287, -127.0
        %v311 = vmax.f32 %v288, -127.0
        %v312 = vmax.f32 %v289, -127.0
        %v313 = vmax.f32 %v290, -127.0
        %v314 = vmax.f32 %v291, -127.0
        %v315 = vmax.f32 %v292, -127.0
        %v316 = vmax.f32 %v293, -127.0
        %v317 = vmax.f32 %v294, -127.0
        %v318 = vmax.f32 %v295, -127.0
        %v319 = vmax.f32 %v296, -127.0
        %v320 = vmax.f32 %v297, -127.0
        %v321 = vmax.f32 %v298, -127.0
        %v322 = vmax.f32 %v299, -127.0
        %v323 = vmax.f32 %v300, -127.0
        %v324 = vmax.f32 %v301, -127.0
        %v325 = vmax.f32 %v302, -127.0
        %v326 = vmax.f32 %v303, -127.0
        %v327 = vmax.f32 %v304, -127.0
        %v328 = vmax.f32 %v305, -127.0
        %v329 = vmax.f32 %v306, -127.0
        %v330 = vmax.f32 %v307, -127.0
        %v331 = vmax.f32 %v308, -127.0
        %v332 = vmax.f32 %v309, -127.0
        %v333 = vmin.f32 %v310, 127.0
        %v334 = vmin.f32 %v311, 127.0
        %v335 = vmin.f32 %v312, 127.0
        %v336 = vmin.f32 %v313, 127.0
        %v337 = vmin.f32 %v314, 127.0
        %v338 = vmin.f32 %v315, 127.0
        %v339 = vmin.f32 %v316, 127.0
        %v340 = vmin.f32 %v317, 127.0
        %v341 = vmin.f32 %v318, 127.0
        %v342 = vmin.f32 %v319, 127.0
        %v343 = vmin.f32 %v320, 127.0
        %v344 = vmin.f32 %v321, 127.0
        %v345 = vmin.f32 %v322, 127.0
        %v346 = vmin.f32 %v323, 127.0
        %v347 = vmin.f32 %v324, 127.0
        %v348 = vmin.f32 %v325, 127.0
        %v349 = vmin.f32 %v326, 127.0
        %v350 = vmin.f32 %v327, 127.0
        %v351 = vmin.f32 %v328, 127.0
        %v352 = vmin.f32 %v329, 127.0
        %v353 = vmin.f32 %v330, 127.0
        %v354 = vmin.f32 %v331, 127.0
        %v355 = vmin.f32 %v332, 127.0
        %v356 = vpack.c.bf16 %v333, %v333
        %v357 = vpack.c.bf16 %v334, %v334
        %v358 = vpack.c.bf16 %v335, %v335
        %v359 = vpack.c.bf16 %v336, %v336
        %v360 = vpack.c.bf16 %v337, %v337
        %v361 = vpack.c.bf16 %v338, %v338
        %v362 = vpack.c.bf16 %v339, %v339
        %v363 = vpack.c.bf16 %v340, %v340
        %v364 = vpack.c.bf16 %v341, %v341
        %v365 = vpack.c.bf16 %v342, %v342
        %v366 = vpack.c.bf16 %v343, %v343
        %v367 = vpack.c.bf16 %v344, %v344
        %v368 = vpack.c.bf16 %v345, %v345
        %v369 = vpack.c.bf16 %v346, %v346
        %v370 = vpack.c.bf16 %v347, %v347
        %v371 = vpack.c.bf16 %v348, %v348
        %v372 = vpack.c.bf16 %v349, %v349
        %v373 = vpack.c.bf16 %v350, %v350
        %v374 = vpack.c.bf16 %v351, %v351
        %v375 = vpack.c.bf16 %v352, %v352
        %v376 = vpack.c.bf16 %v353, %v353
        %v377 = vpack.c.bf16 %v354, %v354
        %v378 = vpack.c.bf16 %v355, %v355
        %vm379 = vcmask 60416
        %380 = vst.msk [vmem:[#allocation2] sm:$0xf] %vm379, %v356
        %381 = vst.msk [vmem:[#allocation2 + $0x4] sm:$0xf] %vm379, %v357
        %382 = vst.msk [vmem:[#allocation2 + $0x8] sm:$0xf] %vm379, %v358
        %383 = vst.msk [vmem:[#allocation2 + $0xc] sm:$0xf] %vm379, %v359
        %384 = vst.msk [vmem:[#allocation2 + $0x10] sm:$0xf] %vm379, %v360
        %385 = vst.msk [vmem:[#allocation2 + $0x14] sm:$0xf] %vm379, %v361
        %386 = vst.msk [vmem:[#allocation2 + $0x18] sm:$0xf] %vm379, %v362
        %387 = vst.msk [vmem:[#allocation2 + $0x1c] sm:$0xf] %vm379, %v363
        %388 = vst.msk [vmem:[#allocation2 + $0x20] sm:$0xf] %vm379, %v364
        %389 = vst.msk [vmem:[#allocation2 + $0x24] sm:$0xf] %vm379, %v365
        %390 = vst.msk [vmem:[#allocation2 + $0x28] sm:$0xf] %vm379, %v366
        %391 = vst.msk [vmem:[#allocation2 + $0x2c] sm:$0xf] %vm379, %v367
        %392 = vst.msk [vmem:[#allocation2 + $0x30] sm:$0xf] %vm379, %v368
        %393 = vst.msk [vmem:[#allocation2 + $0x34] sm:$0xf] %vm379, %v369
        %394 = vst.msk [vmem:[#allocation2 + $0x38] sm:$0xf] %vm379, %v370
        %395 = vst.msk [vmem:[#allocation2 + $0x3c] sm:$0xf] %vm379, %v371
        %396 = vst.msk [vmem:[#allocation2 + $0x40] sm:$0xf] %vm379, %v372
        %397 = vst.msk [vmem:[#allocation2 + $0x44] sm:$0xf] %vm379, %v373
        %398 = vst.msk [vmem:[#allocation2 + $0x48] sm:$0xf] %vm379, %v374
        %399 = vst.msk [vmem:[#allocation2 + $0x4c] sm:$0xf] %vm379, %v375
        %400 = vst.msk [vmem:[#allocation2 + $0x50] sm:$0xf] %vm379, %v376
        %401 = vst.msk [vmem:[#allocation2 + $0x54] sm:$0xf] %vm379, %v377
        %402 = vst.msk [vmem:[#allocation2 + $0x58] sm:$0xf] %vm379, %v378
        %v403 = vld [vmem:[#allocation2] sm:$0xf]
        %v404 = vld [vmem:[#allocation2 + $0x4] sm:$0xf]
        %v405 = vld [vmem:[#allocation2 + $0x8] sm:$0xf]
        %v406 = vld [vmem:[#allocation2 + $0xc] sm:$0xf]
        %v407 = vld [vmem:[#allocation2 + $0x10] sm:$0xf]
        %v408 = vld [vmem:[#allocation2 + $0x14] sm:$0xf]
        %v409 = vld [vmem:[#allocation2 + $0x18] sm:$0xf]
        %v410 = vld [vmem:[#allocation2 + $0x1c] sm:$0xf]
        %v411 = vld [vmem:[#allocation2 + $0x20] sm:$0xf]
        %v412 = vld [vmem:[#allocation2 + $0x24] sm:$0xf]
        %v413 = vld [vmem:[#allocation2 + $0x28] sm:$0xf]
        %v414 = vld [vmem:[#allocation2 + $0x2c] sm:$0xf]
        %v415 = vld [vmem:[#allocation2 + $0x30] sm:$0xf]
        %v416 = vld [vmem:[#allocation2 + $0x34] sm:$0xf]
        %v417 = vld [vmem:[#allocation2 + $0x38] sm:$0xf]
        %v418 = vld [vmem:[#allocation2 + $0x3c] sm:$0xf]
        %v419 = vld [vmem:[#allocation2 + $0x40] sm:$0xf]
        %v420 = vld [vmem:[#allocation2 + $0x44] sm:$0xf]
        %421 = vst.msk [vmem:[#allocation3] sm:$0xf] %vm379, %v403
        %422 = vst.msk [vmem:[#allocation3 + $0x4] sm:$0xf] %vm379, %v404
        %423 = vst.msk [vmem:[#allocation3 + $0x8] sm:$0xf] %vm379, %v405
        %424 = vst.msk [vmem:[#allocation3 + $0xc] sm:$0xf] %vm379, %v406
        %425 = vst.msk [vmem:[#allocation3 + $0x10] sm:$0xf] %vm379, %v407
        %426 = vst.msk [vmem:[#allocation3 + $0x14] sm:$0xf] %vm379, %v408
        %427 = vst.msk [vmem:[#allocation3 + $0x18] sm:$0xf] %vm379, %v409
        %428 = vst.msk [vmem:[#allocation3 + $0x1c] sm:$0xf] %vm379, %v410
        %429 = vst.msk [vmem:[#allocation3 + $0x20] sm:$0xf] %vm379, %v411
        %430 = vst.msk [vmem:[#allocation3 + $0x24] sm:$0xf] %vm379, %v412
        %431 = vst.msk [vmem:[#allocation3 + $0x28] sm:$0xf] %vm379, %v413
        %432 = vst.msk [vmem:[#allocation3 + $0x2c] sm:$0xf] %vm379, %v414
        %433 = vst.msk [vmem:[#allocation3 + $0x30] sm:$0xf] %vm379, %v415
        %434 = vst.msk [vmem:[#allocation3 + $0x34] sm:$0xf] %vm379, %v416
        %435 = vst.msk [vmem:[#allocation3 + $0x38] sm:$0xf] %vm379, %v417
        %436 = vst.msk [vmem:[#allocation3 + $0x3c] sm:$0xf] %vm379, %v418
        %437 = vst.msk [vmem:[#allocation3 + $0x40] sm:$0xf] %vm379, %v419
        %438 = vst.msk [vmem:[#allocation3 + $0x44] sm:$0xf] %vm379, %v420
        %v439 = vld [vmem:[#allocation2] sm:$0xf]
        %v440 = vld [vmem:[#allocation2 + $0x4] sm:$0xf]
        %v441 = vld [vmem:[#allocation2 + $0x8] sm:$0xf]
        %v442 = vld [vmem:[#allocation2 + $0xc] sm:$0xf]
        %v443 = vld [vmem:[#allocation2 + $0x10] sm:$0xf]
        %v444 = vld [vmem:[#allocation2 + $0x14] sm:$0xf]
        %v445 = vld [vmem:[#allocation2 + $0x18] sm:$0xf]
        %v446 = vld [vmem:[#allocation2 + $0x1c] sm:$0xf]
        %v447 = vld [vmem:[#allocation2 + $0x20] sm:$0xf]
        %v448 = vld [vmem:[#allocation2 + $0x24] sm:$0xf]
        %v449 = vld [vmem:[#allocation2 + $0x28] sm:$0xf]
        %v450 = vld [vmem:[#allocation2 + $0x2c] sm:$0xf]
        %v451 = vld [vmem:[#allocation2 + $0x30] sm:$0xf]
        %v452 = vld [vmem:[#allocation2 + $0x34] sm:$0xf]
        %v453 = vld [vmem:[#allocation2 + $0x38] sm:$0xf]
        %v454 = vld [vmem:[#allocation2 + $0x3c] sm:$0xf]
        %v455 = vld [vmem:[#allocation2 + $0x40] sm:$0xf]
        %v456 = vld [vmem:[#allocation2 + $0x44] sm:$0xf]
        %v457 = vld [vmem:[#allocation2 + $0x48] sm:$0x1]
        %vm458 = vsmask.f32 3328
        %vm459 = vsmask.f32 7440
        %vm460 = vmor %vm458, %vm459
        %v462 = vshrl.u32 %v439, 16
        %v464 = vrot.slane %v462, 4
        %v465 = vshll.u32 %v439, 16
        %v467 = vrot.slane %v465, 5
        %v468 = vor.u32 %v464, %v467
        %v469 = vrot.slane %v468, 4
        %v471 = vshll.u32 %v440, 16
        %v473 = vrot.slane %v471, 5
        %v474 = vsel %vm460, %v469, %v473
        %v475 = vshrl.u32 %v440, 16
        %v477 = vrot.slane %v475, 4
        %v478 = vor.u32 %v477, %v473
        %v479 = vrot.slane %v478, 4
        %v481 = vshll.u32 %v441, 16
        %v483 = vrot.slane %v481, 5
        %v484 = vsel %vm460, %v479, %v483
        %v485 = vshrl.u32 %v441, 16
        %v487 = vrot.slane %v485, 4
        %v488 = vor.u32 %v487, %v483
        %v489 = vrot.slane %v488, 4
        %v491 = vshll.u32 %v442, 16
        %v493 = vrot.slane %v491, 5
        %v494 = vsel %vm460, %v489, %v493
        %v495 = vshrl.u32 %v442, 16
        %v497 = vrot.slane %v495, 4
        %v498 = vor.u32 %v497, %v493
        %v499 = vrot.slane %v498, 4
        %v501 = vshll.u32 %v443, 16
        %v503 = vrot.slane %v501, 5
        %v504 = vsel %vm460, %v499, %v503
        %v505 = vshrl.u32 %v443, 16
        %v507 = vrot.slane %v505, 4
        %v508 = vor.u32 %v507, %v503
        %v509 = vrot.slane %v508, 4
        %v511 = vshll.u32 %v444, 16
        %v513 = vrot.slane %v511, 5
        %v514 = vsel %vm460, %v509, %v513
        %v515 = vshrl.u32 %v444, 16
        %v517 = vrot.slane %v515, 4
        %v518 = vor.u32 %v517, %v513
        %v519 = vrot.slane %v518, 4
        %v521 = vshll.u32 %v445, 16
        %v523 = vrot.slane %v521, 5
        %v524 = vsel %vm460, %v519, %v523
        %v525 = vshrl.u32 %v445, 16
        %v527 = vrot.slane %v525, 4
        %v528 = vor.u32 %v527, %v523
        %v529 = vrot.slane %v528, 4
        %v531 = vshll.u32 %v446, 16
        %v533 = vrot.slane %v531, 5
        %v534 = vsel %vm460, %v529, %v533
        %v535 = vshrl.u32 %v446, 16
        %v537 = vrot.slane %v535, 4
        %v538 = vor.u32 %v537, %v533
        %v539 = vrot.slane %v538, 4
        %v541 = vshll.u32 %v447, 16
        %v543 = vrot.slane %v541, 5
        %v544 = vsel %vm460, %v539, %v543
        %v545 = vshrl.u32 %v447, 16
        %v547 = vrot.slane %v545, 4
        %v548 = vor.u32 %v547, %v543
        %v549 = vrot.slane %v548, 4
        %v551 = vshll.u32 %v448, 16
        %v553 = vrot.slane %v551, 5
        %v554 = vsel %vm460, %v549, %v553
        %v555 = vshrl.u32 %v448, 16
        %v557 = vrot.slane %v555, 4
        %v558 = vor.u32 %v557, %v553
        %v559 = vrot.slane %v558, 4
        %v561 = vshll.u32 %v449, 16
        %v563 = vrot.slane %v561, 5
        %v564 = vsel %vm460, %v559, %v563
        %v565 = vshrl.u32 %v449, 16
        %v567 = vrot.slane %v565, 4
        %v568 = vor.u32 %v567, %v563
        %v569 = vrot.slane %v568, 4
        %v571 = vshll.u32 %v450, 16
        %v573 = vrot.slane %v571, 5
        %v574 = vsel %vm460, %v569, %v573
        %v575 = vshrl.u32 %v450, 16
        %v577 = vrot.slane %v575, 4
        %v578 = vor.u32 %v577, %v573
        %v579 = vrot.slane %v578, 4
        %v581 = vshll.u32 %v451, 16
        %v583 = vrot.slane %v581, 5
        %v584 = vsel %vm460, %v579, %v583
        %v585 = vshrl.u32 %v451, 16
        %v587 = vrot.slane %v585, 4
        %v588 = vor.u32 %v587, %v583
        %v589 = vrot.slane %v588, 4
        %v591 = vshll.u32 %v452, 16
        %v593 = vrot.slane %v591, 5
        %v594 = vsel %vm460, %v589, %v593
        %v595 = vshrl.u32 %v452, 16
        %v597 = vrot.slane %v595, 4
        %v598 = vor.u32 %v597, %v593
        %v599 = vrot.slane %v598, 4
        %v601 = vshll.u32 %v453, 16
        %v603 = vrot.slane %v601, 5
        %v604 = vsel %vm460, %v599, %v603
        %v605 = vshrl.u32 %v453, 16
        %v607 = vrot.slane %v605, 4
        %v608 = vor.u32 %v607, %v603
        %v609 = vrot.slane %v608, 4
        %v611 = vshll.u32 %v454, 16
        %v613 = vrot.slane %v611, 5
        %v614 = vsel %vm460, %v609, %v613
        %v615 = vshrl.u32 %v454, 16
        %v617 = vrot.slane %v615, 4
        %v618 = vor.u32 %v617, %v613
        %v619 = vrot.slane %v618, 4
        %v621 = vshll.u32 %v455, 16
        %v623 = vrot.slane %v621, 5
        %v624 = vsel %vm460, %v619, %v623
        %v625 = vshrl.u32 %v455, 16
        %v627 = vrot.slane %v625, 4
        %v628 = vor.u32 %v627, %v623
        %v629 = vrot.slane %v628, 4
        %v631 = vshll.u32 %v456, 16
        %v633 = vrot.slane %v631, 5
        %v634 = vsel %vm460, %v629, %v633
        %v635 = vshrl.u32 %v456, 16
        %v637 = vrot.slane %v635, 4
        %v638 = vor.u32 %v637, %v633
        %v639 = vrot.slane %v638, 4
        %v641 = vshll.u32 %v457, 16
        %v643 = vrot.slane %v641, 5
        %v644 = vsel %vm460, %v639, %v643
        %645 = vrot.lane.b32.xlu0 %v474, 8
        %v646 = vpop.permute.xlu0 %645
        %647 = vrot.lane.b32.xlu0 %v484, 8
        %v648 = vpop.permute.xlu0 %647
        %649 = vrot.lane.b32.xlu0 %v494, 8
        %v650 = vpop.permute.xlu0 %649
        %651 = vrot.lane.b32.xlu0 %v504, 8
        %v652 = vpop.permute.xlu0 %651
        %653 = vrot.lane.b32.xlu0 %v514, 8
        %v654 = vpop.permute.xlu0 %653
        %655 = vrot.lane.b32.xlu0 %v524, 8
        %v656 = vpop.permute.xlu0 %655
        %657 = vrot.lane.b32.xlu0 %v534, 8
        %v658 = vpop.permute.xlu0 %657
        %659 = vrot.lane.b32.xlu0 %v544, 8
        %v660 = vpop.permute.xlu0 %659
        %661 = vrot.lane.b32.xlu0 %v554, 8
        %v662 = vpop.permute.xlu0 %661
        %663 = vrot.lane.b32.xlu0 %v564, 8
        %v664 = vpop.permute.xlu0 %663
        %665 = vrot.lane.b32.xlu0 %v574, 8
        %v666 = vpop.permute.xlu0 %665
        %667 = vrot.lane.b32.xlu0 %v584, 8
        %v668 = vpop.permute.xlu0 %667
        %669 = vrot.lane.b32.xlu0 %v594, 8
        %v670 = vpop.permute.xlu0 %669
        %671 = vrot.lane.b32.xlu0 %v604, 8
        %v672 = vpop.permute.xlu0 %671
        %673 = vrot.lane.b32.xlu0 %v614, 8
        %v674 = vpop.permute.xlu0 %673
        %675 = vrot.lane.b32.xlu0 %v624, 8
        %v676 = vpop.permute.xlu0 %675
        %677 = vrot.lane.b32.xlu0 %v634, 8
        %v678 = vpop.permute.xlu0 %677
        %679 = vrot.lane.b32.xlu0 %v644, 8
        %v680 = vpop.permute.xlu0 %679
        %vm699 = vcmask 126016
        %700 = vst.msk [vmem:[#allocation3] sm:$0xf] %vm699, %v646
        %701 = vst.msk [vmem:[#allocation3 + $0x4] sm:$0xf] %vm699, %v648
        %702 = vst.msk [vmem:[#allocation3 + $0x8] sm:$0xf] %vm699, %v650
        %703 = vst.msk [vmem:[#allocation3 + $0xc] sm:$0xf] %vm699, %v652
        %704 = vst.msk [vmem:[#allocation3 + $0x10] sm:$0xf] %vm699, %v654
        %705 = vst.msk [vmem:[#allocation3 + $0x14] sm:$0xf] %vm699, %v656
        %706 = vst.msk [vmem:[#allocation3 + $0x18] sm:$0xf] %vm699, %v658
        %707 = vst.msk [vmem:[#allocation3 + $0x1c] sm:$0xf] %vm699, %v660
        %708 = vst.msk [vmem:[#allocation3 + $0x20] sm:$0xf] %vm699, %v662
        %709 = vst.msk [vmem:[#allocation3 + $0x24] sm:$0xf] %vm699, %v664
        %710 = vst.msk [vmem:[#allocation3 + $0x28] sm:$0xf] %vm699, %v666
        %711 = vst.msk [vmem:[#allocation3 + $0x2c] sm:$0xf] %vm699, %v668
        %712 = vst.msk [vmem:[#allocation3 + $0x30] sm:$0xf] %vm699, %v670
        %713 = vst.msk [vmem:[#allocation3 + $0x34] sm:$0xf] %vm699, %v672
        %714 = vst.msk [vmem:[#allocation3 + $0x38] sm:$0xf] %vm699, %v674
        %715 = vst.msk [vmem:[#allocation3 + $0x3c] sm:$0xf] %vm699, %v676
        %716 = vst.msk [vmem:[#allocation3 + $0x40] sm:$0xf] %vm699, %v678
        %717 = vst.msk [vmem:[#allocation3 + $0x44] sm:$0xf] %vm699, %v680
        %v718 = vld [vmem:[#allocation2] sm:$0xe]
        %v719 = vld [vmem:[#allocation2 + $0x4] sm:$0xf]
        %v720 = vld [vmem:[#allocation2 + $0x8] sm:$0xf]
        %v721 = vld [vmem:[#allocation2 + $0xc] sm:$0xf]
        %v722 = vld [vmem:[#allocation2 + $0x10] sm:$0xf]
        %v723 = vld [vmem:[#allocation2 + $0x14] sm:$0xf]
        %v724 = vld [vmem:[#allocation2 + $0x18] sm:$0xf]
        %v725 = vld [vmem:[#allocation2 + $0x1c] sm:$0xf]
        %v726 = vld [vmem:[#allocation2 + $0x20] sm:$0xf]
        %v727 = vld [vmem:[#allocation2 + $0x24] sm:$0xf]
        %v728 = vld [vmem:[#allocation2 + $0x28] sm:$0xf]
        %v729 = vld [vmem:[#allocation2 + $0x2c] sm:$0xf]
        %v730 = vld [vmem:[#allocation2 + $0x30] sm:$0xf]
        %v731 = vld [vmem:[#allocation2 + $0x34] sm:$0xf]
        %v732 = vld [vmem:[#allocation2 + $0x38] sm:$0xf]
        %v733 = vld [vmem:[#allocation2 + $0x3c] sm:$0xf]
        %v734 = vld [vmem:[#allocation2 + $0x40] sm:$0xf]
        %v735 = vld [vmem:[#allocation2 + $0x44] sm:$0xf]
        %v736 = vld [vmem:[#allocation2 + $0x48] sm:$0x1]
        %vm756 = vcmask 1042432
        %vm757 = vcmask 1046532
        %vm758 = vmor %vm756, %vm757
        %v759 = vrot.slane %v718, 5
        %v760 = vrot.slane %v759, 4
        %v761 = vrot.slane %v719, 5
        %v762 = vsel %vm758, %v760, %v761
        %v763 = vrot.slane %v761, 4
        %v764 = vrot.slane %v720, 5
        %v765 = vsel %vm758, %v763, %v764
        %v766 = vrot.slane %v764, 4
        %v767 = vrot.slane %v721, 5
        %v768 = vsel %vm758, %v766, %v767
        %v769 = vrot.slane %v767, 4
        %v770 = vrot.slane %v722, 5
        %v771 = vsel %vm758, %v769, %v770
        %v772 = vrot.slane %v770, 4
        %v773 = vrot.slane %v723, 5
        %v774 = vsel %vm758, %v772, %v773
        %v775 = vrot.slane %v773, 4
        %v776 = vrot.slane %v724, 5
        %v777 = vsel %vm758, %v775, %v776
        %v778 = vrot.slane %v776, 4
        %v779 = vrot.slane %v725, 5
        %v780 = vsel %vm758, %v778, %v779
        %v781 = vrot.slane %v779, 4
        %v782 = vrot.slane %v726, 5
        %v783 = vsel %vm758, %v781, %v782
        %v784 = vrot.slane %v782, 4
        %v785 = vrot.slane %v727, 5
        %v786 = vsel %vm758, %v784, %v785
        %v787 = vrot.slane %v785, 4
        %v788 = vrot.slane %v728, 5
        %v789 = vsel %vm758, %v787, %v788
        %v790 = vrot.slane %v788, 4
        %v791 = vrot.slane %v729, 5
        %v792 = vsel %vm758, %v790, %v791
        %v793 = vrot.slane %v791, 4
        %v794 = vrot.slane %v730, 5
        %v795 = vsel %vm758, %v793, %v794
        %v796 = vrot.slane %v794, 4
        %v797 = vrot.slane %v731, 5
        %v798 = vsel %vm758, %v796, %v797
        %v799 = vrot.slane %v797, 4
        %v800 = vrot.slane %v732, 5
        %v801 = vsel %vm758, %v799, %v800
        %v802 = vrot.slane %v800, 4
        %v803 = vrot.slane %v733, 5
        %v804 = vsel %vm758, %v802, %v803
        %v805 = vrot.slane %v803, 4
        %v806 = vrot.slane %v734, 5
        %v807 = vsel %vm758, %v805, %v806
        %v808 = vrot.slane %v806, 4
        %v809 = vrot.slane %v735, 5
        %v810 = vsel %vm758, %v808, %v809
        %v811 = vrot.slane %v809, 4
        %v812 = vrot.slane %v736, 5
        %v813 = vsel %vm758, %v811, %v812
        %814 = vrot.lane.b32.xlu0 %v762, 16
        %v815 = vpop.permute.xlu0 %814
        %816 = vrot.lane.b32.xlu0 %v765, 16
        %v817 = vpop.permute.xlu0 %816
        %818 = vrot.lane.b32.xlu0 %v768, 16
        %v819 = vpop.permute.xlu0 %818
        %820 = vrot.lane.b32.xlu0 %v771, 16
        %v821 = vpop.permute.xlu0 %820
        %822 = vrot.lane.b32.xlu0 %v774, 16
        %v823 = vpop.permute.xlu0 %822
        %824 = vrot.lane.b32.xlu0 %v777, 16
        %v825 = vpop.permute.xlu0 %824
        %826 = vrot.lane.b32.xlu0 %v780, 16
        %v827 = vpop.permute.xlu0 %826
        %828 = vrot.lane.b32.xlu0 %v783, 16
        %v829 = vpop.permute.xlu0 %828
        %830 = vrot.lane.b32.xlu0 %v786, 16
        %v831 = vpop.permute.xlu0 %830
        %832 = vrot.lane.b32.xlu0 %v789, 16
        %v833 = vpop.permute.xlu0 %832
        %834 = vrot.lane.b32.xlu0 %v792, 16
        %v835 = vpop.permute.xlu0 %834
        %836 = vrot.lane.b32.xlu0 %v795, 16
        %v837 = vpop.permute.xlu0 %836
        %838 = vrot.lane.b32.xlu0 %v798, 16
        %v839 = vpop.permute.xlu0 %838
        %840 = vrot.lane.b32.xlu0 %v801, 16
        %v841 = vpop.permute.xlu0 %840
        %842 = vrot.lane.b32.xlu0 %v804, 16
        %v843 = vpop.permute.xlu0 %842
        %844 = vrot.lane.b32.xlu0 %v807, 16
        %v845 = vpop.permute.xlu0 %844
        %846 = vrot.lane.b32.xlu0 %v810, 16
        %v847 = vpop.permute.xlu0 %846
        %848 = vrot.lane.b32.xlu0 %v813, 16
        %v849 = vpop.permute.xlu0 %848
        %vm868 = vcmask 191616
        %869 = vst.msk [vmem:[#allocation3] sm:$0xf] %vm868, %v815
        %870 = vst.msk [vmem:[#allocation3 + $0x4] sm:$0xf] %vm868, %v817
        %871 = vst.msk [vmem:[#allocation3 + $0x8] sm:$0xf] %vm868, %v819
        %872 = vst.msk [vmem:[#allocation3 + $0xc] sm:$0xf] %vm868, %v821
        %873 = vst.msk [vmem:[#allocation3 + $0x10] sm:$0xf] %vm868, %v823
        %874 = vst.msk [vmem:[#allocation3 + $0x14] sm:$0xf] %vm868, %v825
        %875 = vst.msk [vmem:[#allocation3 + $0x18] sm:$0xf] %vm868, %v827
        %876 = vst.msk [vmem:[#allocation3 + $0x1c] sm:$0xf] %vm868, %v829
        %877 = vst.msk [vmem:[#allocation3 + $0x20] sm:$0xf] %vm868, %v831
        %878 = vst.msk [vmem:[#allocation3 + $0x24] sm:$0xf] %vm868, %v833
        %879 = vst.msk [vmem:[#allocation3 + $0x28] sm:$0xf] %vm868, %v835
        %880 = vst.msk [vmem:[#allocation3 + $0x2c] sm:$0xf] %vm868, %v837
        %881 = vst.msk [vmem:[#allocation3 + $0x30] sm:$0xf] %vm868, %v839
        %882 = vst.msk [vmem:[#allocation3 + $0x34] sm:$0xf] %vm868, %v841
        %883 = vst.msk [vmem:[#allocation3 + $0x38] sm:$0xf] %vm868, %v843
        %884 = vst.msk [vmem:[#allocation3 + $0x3c] sm:$0xf] %vm868, %v845
        %885 = vst.msk [vmem:[#allocation3 + $0x40] sm:$0xf] %vm868, %v847
        %886 = vst.msk [vmem:[#allocation3 + $0x44] sm:$0xf] %vm868, %v849
        %v887 = vld [vmem:[#allocation2 + $0x8] sm:$0xe]
        %v888 = vld [vmem:[#allocation2 + $0xc] sm:$0xf]
        %v889 = vld [vmem:[#allocation2 + $0x10] sm:$0xf]
        %v890 = vld [vmem:[#allocation2 + $0x14] sm:$0xf]
        %v891 = vld [vmem:[#allocation2 + $0x18] sm:$0xf]
        %v892 = vld [vmem:[#allocation2 + $0x1c] sm:$0xf]
        %v893 = vld [vmem:[#allocation2 + $0x20] sm:$0xf]
        %v894 = vld [vmem:[#allocation2 + $0x24] sm:$0xf]
        %v895 = vld [vmem:[#allocation2 + $0x28] sm:$0xf]
        %v896 = vld [vmem:[#allocation2 + $0x2c] sm:$0xf]
        %v897 = vld [vmem:[#allocation2 + $0x30] sm:$0xf]
        %v898 = vld [vmem:[#allocation2 + $0x34] sm:$0xf]
        %v899 = vld [vmem:[#allocation2 + $0x38] sm:$0xf]
        %v900 = vld [vmem:[#allocation2 + $0x3c] sm:$0xf]
        %v901 = vld [vmem:[#allocation2 + $0x40] sm:$0xf]
        %v902 = vld [vmem:[#allocation2 + $0x44] sm:$0xf]
        %v903 = vld [vmem:[#allocation2 + $0x48] sm:$0xf]
        %v904 = vld [vmem:[#allocation2 + $0x4c] sm:$0xf]
        %v905 = vld [vmem:[#allocation2 + $0x50] sm:$0x1]
        %v925 = vrot.slane %v887, 5
        %v926 = vrot.slane %v925, 4
        %v927 = vrot.slane %v888, 5
        %v928 = vsel %vm758, %v926, %v927
        %v929 = vrot.slane %v927, 4
        %v930 = vrot.slane %v889, 5
        %v931 = vsel %vm758, %v929, %v930
        %v932 = vrot.slane %v930, 4
        %v933 = vrot.slane %v890, 5
        %v934 = vsel %vm758, %v932, %v933
        %v935 = vrot.slane %v933, 4
        %v936 = vrot.slane %v891, 5
        %v937 = vsel %vm758, %v935, %v936
        %v938 = vrot.slane %v936, 4
        %v939 = vrot.slane %v892, 5
        %v940 = vsel %vm758, %v938, %v939
        %v941 = vrot.slane %v939, 4
        %v942 = vrot.slane %v893, 5
        %v943 = vsel %vm758, %v941, %v942
        %v944 = vrot.slane %v942, 4
        %v945 = vrot.slane %v894, 5
        %v946 = vsel %vm758, %v944, %v945
        %v947 = vrot.slane %v945, 4
        %v948 = vrot.slane %v895, 5
        %v949 = vsel %vm758, %v947, %v948
        %v950 = vrot.slane %v948, 4
        %v951 = vrot.slane %v896, 5
        %v952 = vsel %vm758, %v950, %v951
        %v953 = vrot.slane %v951, 4
        %v954 = vrot.slane %v897, 5
        %v955 = vsel %vm758, %v953, %v954
        %v956 = vrot.slane %v954, 4
        %v957 = vrot.slane %v898, 5
        %v958 = vsel %vm758, %v956, %v957
        %v959 = vrot.slane %v957, 4
        %v960 = vrot.slane %v899, 5
        %v961 = vsel %vm758, %v959, %v960
        %v962 = vrot.slane %v960, 4
        %v963 = vrot.slane %v900, 5
        %v964 = vsel %vm758, %v962, %v963
        %v965 = vrot.slane %v963, 4
        %v966 = vrot.slane %v901, 5
        %v967 = vsel %vm758, %v965, %v966
        %v968 = vrot.slane %v966, 4
        %v969 = vrot.slane %v902, 5
        %v970 = vsel %vm758, %v968, %v969
        %v971 = vrot.slane %v969, 4
        %v972 = vrot.slane %v903, 5
        %v973 = vsel %vm758, %v971, %v972
        %v974 = vrot.slane %v972, 4
        %v975 = vrot.slane %v904, 5
        %v976 = vsel %vm758, %v974, %v975
        %v977 = vrot.slane %v975, 4
        %v978 = vrot.slane %v905, 5
        %v979 = vsel %vm758, %v977, %v978
        %980 = vrot.lane.b32.xlu0 %v928, 24
        %v981 = vpop.permute.xlu0 %980
        %982 = vrot.lane.b32.xlu0 %v931, 24
        %v983 = vpop.permute.xlu0 %982
        %984 = vrot.lane.b32.xlu0 %v934, 24
        %v985 = vpop.permute.xlu0 %984
        %986 = vrot.lane.b32.xlu0 %v937, 24
        %v987 = vpop.permute.xlu0 %986
        %988 = vrot.lane.b32.xlu0 %v940, 24
        %v989 = vpop.permute.xlu0 %988
        %990 = vrot.lane.b32.xlu0 %v943, 24
        %v991 = vpop.permute.xlu0 %990
        %992 = vrot.lane.b32.xlu0 %v946, 24
        %v993 = vpop.permute.xlu0 %992
        %994 = vrot.lane.b32.xlu0 %v949, 24
        %v995 = vpop.permute.xlu0 %994
        %996 = vrot.lane.b32.xlu0 %v952, 24
        %v997 = vpop.permute.xlu0 %996
        %998 = vrot.lane.b32.xlu0 %v955, 24
        %v999 = vpop.permute.xlu0 %998
        %1000 = vrot.lane.b32.xlu0 %v958, 24
        %v1001 = vpop.permute.xlu0 %1000
        %1002 = vrot.lane.b32.xlu0 %v961, 24
        %v1003 = vpop.permute.xlu0 %1002
        %1004 = vrot.lane.b32.xlu0 %v964, 24
        %v1005 = vpop.permute.xlu0 %1004
        %1006 = vrot.lane.b32.xlu0 %v967, 24
        %v1007 = vpop.permute.xlu0 %1006
        %1008 = vrot.lane.b32.xlu0 %v970, 24
        %v1009 = vpop.permute.xlu0 %1008
        %1010 = vrot.lane.b32.xlu0 %v973, 24
        %v1011 = vpop.permute.xlu0 %1010
        %1012 = vrot.lane.b32.xlu0 %v976, 24
        %v1013 = vpop.permute.xlu0 %1012
        %1014 = vrot.lane.b32.xlu0 %v979, 24
        %v1015 = vpop.permute.xlu0 %1014
        %vm1034 = vcmask 257216
        %1035 = vst.msk [vmem:[#allocation3] sm:$0xf] %vm1034, %v981
        %1036 = vst.msk [vmem:[#allocation3 + $0x4] sm:$0xf] %vm1034, %v983
        %1037 = vst.msk [vmem:[#allocation3 + $0x8] sm:$0xf] %vm1034, %v985
        %1038 = vst.msk [vmem:[#allocation3 + $0xc] sm:$0xf] %vm1034, %v987
        %1039 = vst.msk [vmem:[#allocation3 + $0x10] sm:$0xf] %vm1034, %v989
        %1040 = vst.msk [vmem:[#allocation3 + $0x14] sm:$0xf] %vm1034, %v991
        %1041 = vst.msk [vmem:[#allocation3 + $0x18] sm:$0xf] %vm1034, %v993
        %1042 = vst.msk [vmem:[#allocation3 + $0x1c] sm:$0xf] %vm1034, %v995
        %1043 = vst.msk [vmem:[#allocation3 + $0x20] sm:$0xf] %vm1034, %v997
        %1044 = vst.msk [vmem:[#allocation3 + $0x24] sm:$0xf] %vm1034, %v999
        %1045 = vst.msk [vmem:[#allocation3 + $0x28] sm:$0xf] %vm1034, %v1001
        %1046 = vst.msk [vmem:[#allocation3 + $0x2c] sm:$0xf] %vm1034, %v1003
        %1047 = vst.msk [vmem:[#allocation3 + $0x30] sm:$0xf] %vm1034, %v1005
        %1048 = vst.msk [vmem:[#allocation3 + $0x34] sm:$0xf] %vm1034, %v1007
        %1049 = vst.msk [vmem:[#allocation3 + $0x38] sm:$0xf] %vm1034, %v1009
        %1050 = vst.msk [vmem:[#allocation3 + $0x3c] sm:$0xf] %vm1034, %v1011
        %1051 = vst.msk [vmem:[#allocation3 + $0x40] sm:$0xf] %vm1034, %v1013
        %1052 = vst.msk [vmem:[#allocation3 + $0x44] sm:$0xf] %vm1034, %v1015
        %v1053 = vld [vmem:[#allocation2 + $0x8] sm:$0xe]
        %v1054 = vld [vmem:[#allocation2 + $0xc] sm:$0xf]
        %v1055 = vld [vmem:[#allocation2 + $0x10] sm:$0xf]
        %v1056 = vld [vmem:[#allocation2 + $0x14] sm:$0xf]
        %v1057 = vld [vmem:[#allocation2 + $0x18] sm:$0xf]
        %v1058 = vld [vmem:[#allocation2 + $0x1c] sm:$0xf]
        %v1059 = vld [vmem:[#allocation2 + $0x20] sm:$0xf]
        %v1060 = vld [vmem:[#allocation2 + $0x24] sm:$0xf]
        %v1061 = vld [vmem:[#allocation2 + $0x28] sm:$0xf]
        %v1062 = vld [vmem:[#allocation2 + $0x2c] sm:$0xf]
        %v1063 = vld [vmem:[#allocation2 + $0x30] sm:$0xf]
        %v1064 = vld [vmem:[#allocation2 + $0x34] sm:$0xf]
        %v1065 = vld [vmem:[#allocation2 + $0x38] sm:$0xf]
        %v1066 = vld [vmem:[#allocation2 + $0x3c] sm:$0xf]
        %v1067 = vld [vmem:[#allocation2 + $0x40] sm:$0xf]
        %v1068 = vld [vmem:[#allocation2 + $0x44] sm:$0xf]
        %v1069 = vld [vmem:[#allocation2 + $0x48] sm:$0xf]
        %v1070 = vld [vmem:[#allocation2 + $0x4c] sm:$0xf]
        %v1071 = vld [vmem:[#allocation2 + $0x50] sm:$0x3]
        %vm1072 = vsmask.f32 2304
        %vm1073 = vsmask.f32 6416
        %vm1074 = vmor %vm1072, %vm1073
        %v1076 = vshrl.u32 %v1053, 16
        %v1078 = vrot.slane %v1076, 5
        %v1079 = vshll.u32 %v1053, 16
        %v1081 = vrot.slane %v1079, 6
        %v1082 = vor.u32 %v1078, %v1081
        %v1083 = vrot.slane %v1082, 4
        %v1085 = vshrl.u32 %v1054, 16
        %v1087 = vrot.slane %v1085, 5
        %v1088 = vshll.u32 %v1054, 16
        %v1090 = vrot.slane %v1088, 6
        %v1091 = vor.u32 %v1087, %v1090
        %v1092 = vsel %vm1074, %v1083, %v1091
        %v1093 = vrot.slane %v1091, 4
        %v1095 = vshrl.u32 %v1055, 16
        %v1097 = vrot.slane %v1095, 5
        %v1098 = vshll.u32 %v1055, 16
        %v1100 = vrot.slane %v1098, 6
        %v1101 = vor.u32 %v1097, %v1100
        %v1102 = vsel %vm1074, %v1093, %v1101
        %v1103 = vrot.slane %v1101, 4
        %v1105 = vshrl.u32 %v1056, 16
        %v1107 = vrot.slane %v1105, 5
        %v1108 = vshll.u32 %v1056, 16
        %v1110 = vrot.slane %v1108, 6
        %v1111 = vor.u32 %v1107, %v1110
        %v1112 = vsel %vm1074, %v1103, %v1111
        %v1113 = vrot.slane %v1111, 4
        %v1115 = vshrl.u32 %v1057, 16
        %v1117 = vrot.slane %v1115, 5
        %v1118 = vshll.u32 %v1057, 16
        %v1120 = vrot.slane %v1118, 6
        %v1121 = vor.u32 %v1117, %v1120
        %v1122 = vsel %vm1074, %v1113, %v1121
        %v1123 = vrot.slane %v1121, 4
        %v1125 = vshrl.u32 %v1058, 16
        %v1127 = vrot.slane %v1125, 5
        %v1128 = vshll.u32 %v1058, 16
        %v1130 = vrot.slane %v1128, 6
        %v1131 = vor.u32 %v1127, %v1130
        %v1132 = vsel %vm1074, %v1123, %v1131
        %v1133 = vrot.slane %v1131, 4
        %v1135 = vshrl.u32 %v1059, 16
        %v1137 = vrot.slane %v1135, 5
        %v1138 = vshll.u32 %v1059, 16
        %v1140 = vrot.slane %v1138, 6
        %v1141 = vor.u32 %v1137, %v1140
        %v1142 = vsel %vm1074, %v1133, %v1141
        %v1143 = vrot.slane %v1141, 4
        %v1145 = vshrl.u32 %v1060, 16
        %v1147 = vrot.slane %v1145, 5
        %v1148 = vshll.u32 %v1060, 16
        %v1150 = vrot.slane %v1148, 6
        %v1151 = vor.u32 %v1147, %v1150
        %v1152 = vsel %vm1074, %v1143, %v1151
        %v1153 = vrot.slane %v1151, 4
        %v1155 = vshrl.u32 %v1061, 16
        %v1157 = vrot.slane %v1155, 5
        %v1158 = vshll.u32 %v1061, 16
        %v1160 = vrot.slane %v1158, 6
        %v1161 = vor.u32 %v1157, %v1160
        %v1162 = vsel %vm1074, %v1153, %v1161
        %v1163 = vrot.slane %v1161, 4
        %v1165 = vshrl.u32 %v1062, 16
        %v1167 = vrot.slane %v1165, 5
        %v1168 = vshll.u32 %v1062, 16
        %v1170 = vrot.slane %v1168, 6
        %v1171 = vor.u32 %v1167, %v1170
        %v1172 = vsel %vm1074, %v1163, %v1171
        %v1173 = vrot.slane %v1171, 4
        %v1175 = vshrl.u32 %v1063, 16
        %v1177 = vrot.slane %v1175, 5
        %v1178 = vshll.u32 %v1063, 16
        %v1180 = vrot.slane %v1178, 6
        %v1181 = vor.u32 %v1177, %v1180
        %v1182 = vsel %vm1074, %v1173, %v1181
        %v1183 = vrot.slane %v1181, 4
        %v1185 = vshrl.u32 %v1064, 16
        %v1187 = vrot.slane %v1185, 5
        %v1188 = vshll.u32 %v1064, 16
        %v1190 = vrot.slane %v1188, 6
        %v1191 = vor.u32 %v1187, %v1190
        %v1192 = vsel %vm1074, %v1183, %v1191
        %v1193 = vrot.slane %v1191, 4
        %v1195 = vshrl.u32 %v1065, 16
        %v1197 = vrot.slane %v1195, 5
        %v1198 = vshll.u32 %v1065, 16
        %v1200 = vrot.slane %v1198, 6
        %v1201 = vor.u32 %v1197, %v1200
        %v1202 = vsel %vm1074, %v1193, %v1201
        %v1203 = vrot.slane %v1201, 4
        %v1205 = vshrl.u32 %v1066, 16
        %v1207 = vrot.slane %v1205, 5
        %v1208 = vshll.u32 %v1066, 16
        %v1210 = vrot.slane %v1208, 6
        %v1211 = vor.u32 %v1207, %v1210
        %v1212 = vsel %vm1074, %v1203, %v1211
        %v1213 = vrot.slane %v1211, 4
        %v1215 = vshrl.u32 %v1067, 16
        %v1217 = vrot.slane %v1215, 5
        %v1218 = vshll.u32 %v1067, 16
        %v1220 = vrot.slane %v1218, 6
        %v1221 = vor.u32 %v1217, %v1220
        %v1222 = vsel %vm1074, %v1213, %v1221
        %v1223 = vrot.slane %v1221, 4
        %v1225 = vshrl.u32 %v1068, 16
        %v1227 = vrot.slane %v1225, 5
        %v1228 = vshll.u32 %v1068, 16
        %v1230 = vrot.slane %v1228, 6
        %v1231 = vor.u32 %v1227, %v1230
        %v1232 = vsel %vm1074, %v1223, %v1231
        %v1233 = vrot.slane %v1231, 4
        %v1235 = vshrl.u32 %v1069, 16
        %v1237 = vrot.slane %v1235, 5
        %v1238 = vshll.u32 %v1069, 16
        %v1240 = vrot.slane %v1238, 6
        %v1241 = vor.u32 %v1237, %v1240
        %v1242 = vsel %vm1074, %v1233, %v1241
        %v1243 = vrot.slane %v1241, 4
        %v1245 = vshrl.u32 %v1070, 16
        %v1247 = vrot.slane %v1245, 5
        %v1248 = vshll.u32 %v1070, 16
        %v1250 = vrot.slane %v1248, 6
        %v1251 = vor.u32 %v1247, %v1250
        %v1252 = vsel %vm1074, %v1243, %v1251
        %v1253 = vrot.slane %v1251, 4
        %v1255 = vshrl.u32 %v1071, 16
        %v1257 = vrot.slane %v1255, 5
        %v1258 = vshll.u32 %v1071, 16
        %v1260 = vrot.slane %v1258, 6
        %v1261 = vor.u32 %v1257, %v1260
        %v1262 = vsel %vm1074, %v1253, %v1261
        %1263 = vrot.lane.b32.xlu0 %v1092, 32
        %v1264 = vpop.permute.xlu0 %1263
        %1265 = vrot.lane.b32.xlu0 %v1102, 32
        %v1266 = vpop.permute.xlu0 %1265
        %1267 = vrot.lane.b32.xlu0 %v1112, 32
        %v1268 = vpop.permute.xlu0 %1267
        %1269 = vrot.lane.b32.xlu0 %v1122, 32
        %v1270 = vpop.permute.xlu0 %1269
        %1271 = vrot.lane.b32.xlu0 %v1132, 32
        %v1272 = vpop.permute.xlu0 %1271
        %1273 = vrot.lane.b32.xlu0 %v1142, 32
        %v1274 = vpop.permute.xlu0 %1273
        %1275 = vrot.lane.b32.xlu0 %v1152, 32
        %v1276 = vpop.permute.xlu0 %1275
        %1277 = vrot.lane.b32.xlu0 %v1162, 32
        %v1278 = vpop.permute.xlu0 %1277
        %1279 = vrot.lane.b32.xlu0 %v1172, 32
        %v1280 = vpop.permute.xlu0 %1279
        %1281 = vrot.lane.b32.xlu0 %v1182, 32
        %v1282 = vpop.permute.xlu0 %1281
        %1283 = vrot.lane.b32.xlu0 %v1192, 32
        %v1284 = vpop.permute.xlu0 %1283
        %1285 = vrot.lane.b32.xlu0 %v1202, 32
        %v1286 = vpop.permute.xlu0 %1285
        %1287 = vrot.lane.b32.xlu0 %v1212, 32
        %v1288 = vpop.permute.xlu0 %1287
        %1289 = vrot.lane.b32.xlu0 %v1222, 32
        %v1290 = vpop.permute.xlu0 %1289
        %1291 = vrot.lane.b32.xlu0 %v1232, 32
        %v1292 = vpop.permute.xlu0 %1291
        %1293 = vrot.lane.b32.xlu0 %v1242, 32
        %v1294 = vpop.permute.xlu0 %1293
        %1295 = vrot.lane.b32.xlu0 %v1252, 32
        %v1296 = vpop.permute.xlu0 %1295
        %1297 = vrot.lane.b32.xlu0 %v1262, 32
        %v1298 = vpop.permute.xlu0 %1297
        %vm1317 = vcmask 322816
        %1318 = vst.msk [vmem:[#allocation3] sm:$0xf] %vm1317, %v1264
        %1319 = vst.msk [vmem:[#allocation3 + $0x4] sm:$0xf] %vm1317, %v1266
        %1320 = vst.msk [vmem:[#allocation3 + $0x8] sm:$0xf] %vm1317, %v1268
        %1321 = vst.msk [vmem:[#allocation3 + $0xc] sm:$0xf] %vm1317, %v1270
        %1322 = vst.msk [vmem:[#allocation3 + $0x10] sm:$0xf] %vm1317, %v1272
        %1323 = vst.msk [vmem:[#allocation3 + $0x14] sm:$0xf] %vm1317, %v1274
        %1324 = vst.msk [vmem:[#allocation3 + $0x18] sm:$0xf] %vm1317, %v1276
        %1325 = vst.msk [vmem:[#allocation3 + $0x1c] sm:$0xf] %vm1317, %v1278
        %1326 = vst.msk [vmem:[#allocation3 + $0x20] sm:$0xf] %vm1317, %v1280
        %1327 = vst.msk [vmem:[#allocation3 + $0x24] sm:$0xf] %vm1317, %v1282
        %1328 = vst.msk [vmem:[#allocation3 + $0x28] sm:$0xf] %vm1317, %v1284
        %1329 = vst.msk [vmem:[#allocation3 + $0x2c] sm:$0xf] %vm1317, %v1286
        %1330 = vst.msk [vmem:[#allocation3 + $0x30] sm:$0xf] %vm1317, %v1288
        %1331 = vst.msk [vmem:[#allocation3 + $0x34] sm:$0xf] %vm1317, %v1290
        %1332 = vst.msk [vmem:[#allocation3 + $0x38] sm:$0xf] %vm1317, %v1292
        %1333 = vst.msk [vmem:[#allocation3 + $0x3c] sm:$0xf] %vm1317, %v1294
        %1334 = vst.msk [vmem:[#allocation3 + $0x40] sm:$0xf] %vm1317, %v1296
        %1335 = vst.msk [vmem:[#allocation3 + $0x44] sm:$0xf] %vm1317, %v1298
        %v1336 = vld [vmem:[#allocation2 + $0x8] sm:$0xc]
        %v1337 = vld [vmem:[#allocation2 + $0xc] sm:$0xf]
        %v1338 = vld [vmem:[#allocation2 + $0x10] sm:$0xf]
        %v1339 = vld [vmem:[#allocation2 + $0x14] sm:$0xf]
        %v1340 = vld [vmem:[#allocation2 + $0x18] sm:$0xf]
        %v1341 = vld [vmem:[#allocation2 + $0x1c] sm:$0xf]
        %v1342 = vld [vmem:[#allocation2 + $0x20] sm:$0xf]
        %v1343 = vld [vmem:[#allocation2 + $0x24] sm:$0xf]
        %v1344 = vld [vmem:[#allocation2 + $0x28] sm:$0xf]
        %v1345 = vld [vmem:[#allocation2 + $0x2c] sm:$0xf]
        %v1346 = vld [vmem:[#allocation2 + $0x30] sm:$0xf]
        %v1347 = vld [vmem:[#allocation2 + $0x34] sm:$0xf]
        %v1348 = vld [vmem:[#allocation2 + $0x38] sm:$0xf]
        %v1349 = vld [vmem:[#allocation2 + $0x3c] sm:$0xf]
        %v1350 = vld [vmem:[#allocation2 + $0x40] sm:$0xf]
        %v1351 = vld [vmem:[#allocation2 + $0x44] sm:$0xf]
        %v1352 = vld [vmem:[#allocation2 + $0x48] sm:$0xf]
        %v1353 = vld [vmem:[#allocation2 + $0x4c] sm:$0xf]
        %v1354 = vld [vmem:[#allocation2 + $0x50] sm:$0x3]
        %vm1374 = vcmask 1041408
        %vm1375 = vcmask 1045508
        %vm1376 = vmor %vm1374, %vm1375
        %v1377 = vrot.slane %v1336, 6
        %v1378 = vrot.slane %v1377, 4
        %v1379 = vrot.slane %v1337, 6
        %v1380 = vsel %vm1376, %v1378, %v1379
        %v1381 = vrot.slane %v1379, 4
        %v1382 = vrot.slane %v1338, 6
        %v1383 = vsel %vm1376, %v1381, %v1382
        %v1384 = vrot.slane %v1382, 4
        %v1385 = vrot.slane %v1339, 6
        %v1386 = vsel %vm1376, %v1384, %v1385
        %v1387 = vrot.slane %v1385, 4
        %v1388 = vrot.slane %v1340, 6
        %v1389 = vsel %vm1376, %v1387, %v1388
        %v1390 = vrot.slane %v1388, 4
        %v1391 = vrot.slane %v1341, 6
        %v1392 = vsel %vm1376, %v1390, %v1391
        %v1393 = vrot.slane %v1391, 4
        %v1394 = vrot.slane %v1342, 6
        %v1395 = vsel %vm1376, %v1393, %v1394
        %v1396 = vrot.slane %v1394, 4
        %v1397 = vrot.slane %v1343, 6
        %v1398 = vsel %vm1376, %v1396, %v1397
        %v1399 = vrot.slane %v1397, 4
        %v1400 = vrot.slane %v1344, 6
        %v1401 = vsel %vm1376, %v1399, %v1400
        %v1402 = vrot.slane %v1400, 4
        %v1403 = vrot.slane %v1345, 6
        %v1404 = vsel %vm1376, %v1402, %v1403
        %v1405 = vrot.slane %v1403, 4
        %v1406 = vrot.slane %v1346, 6
        %v1407 = vsel %vm1376, %v1405, %v1406
        %v1408 = vrot.slane %v1406, 4
        %v1409 = vrot.slane %v1347, 6
        %v1410 = vsel %vm1376, %v1408, %v1409
        %v1411 = vrot.slane %v1409, 4
        %v1412 = vrot.slane %v1348, 6
        %v1413 = vsel %vm1376, %v1411, %v1412
        %v1414 = vrot.slane %v1412, 4
        %v1415 = vrot.slane %v1349, 6
        %v1416 = vsel %vm1376, %v1414, %v1415
        %v1417 = vrot.slane %v1415, 4
        %v1418 = vrot.slane %v1350, 6
        %v1419 = vsel %vm1376, %v1417, %v1418
        %v1420 = vrot.slane %v1418, 4
        %v1421 = vrot.slane %v1351, 6
        %v1422 = vsel %vm1376, %v1420, %v1421
        %v1423 = vrot.slane %v1421, 4
        %v1424 = vrot.slane %v1352, 6
        %v1425 = vsel %vm1376, %v1423, %v1424
        %v1426 = vrot.slane %v1424, 4
        %v1427 = vrot.slane %v1353, 6
        %v1428 = vsel %vm1376, %v1426, %v1427
        %v1429 = vrot.slane %v1427, 4
        %v1430 = vrot.slane %v1354, 6
        %v1431 = vsel %vm1376, %v1429, %v1430
        %1432 = vrot.lane.b32.xlu0 %v1380, 40
        %v1433 = vpop.permute.xlu0 %1432
        %1434 = vrot.lane.b32.xlu0 %v1383, 40
        %v1435 = vpop.permute.xlu0 %1434
        %1436 = vrot.lane.b32.xlu0 %v1386, 40
        %v1437 = vpop.permute.xlu0 %1436
        %1438 = vrot.lane.b32.xlu0 %v1389, 40
        %v1439 = vpop.permute.xlu0 %1438
        %1440 = vrot.lane.b32.xlu0 %v1392, 40
        %v1441 = vpop.permute.xlu0 %1440
        %1442 = vrot.lane.b32.xlu0 %v1395, 40
        %v1443 = vpop.permute.xlu0 %1442
        %1444 = vrot.lane.b32.xlu0 %v1398, 40
        %v1445 = vpop.permute.xlu0 %1444
        %1446 = vrot.lane.b32.xlu0 %v1401, 40
        %v1447 = vpop.permute.xlu0 %1446
        %1448 = vrot.lane.b32.xlu0 %v1404, 40
        %v1449 = vpop.permute.xlu0 %1448
        %1450 = vrot.lane.b32.xlu0 %v1407, 40
        %v1451 = vpop.permute.xlu0 %1450
        %1452 = vrot.lane.b32.xlu0 %v1410, 40
        %v1453 = vpop.permute.xlu0 %1452
        %1454 = vrot.lane.b32.xlu0 %v1413, 40
        %v1455 = vpop.permute.xlu0 %1454
        %1456 = vrot.lane.b32.xlu0 %v1416, 40
        %v1457 = vpop.permute.xlu0 %1456
        %1458 = vrot.lane.b32.xlu0 %v1419, 40
        %v1459 = vpop.permute.xlu0 %1458
        %1460 = vrot.lane.b32.xlu0 %v1422, 40
        %v1461 = vpop.permute.xlu0 %1460
        %1462 = vrot.lane.b32.xlu0 %v1425, 40
        %v1463 = vpop.permute.xlu0 %1462
        %1464 = vrot.lane.b32.xlu0 %v1428, 40
        %v1465 = vpop.permute.xlu0 %1464
        %1466 = vrot.lane.b32.xlu0 %v1431, 40
        %v1467 = vpop.permute.xlu0 %1466
        %vm1486 = vcmask 388416
        %1487 = vst.msk [vmem:[#allocation3] sm:$0xf] %vm1486, %v1433
        %1488 = vst.msk [vmem:[#allocation3 + $0x4] sm:$0xf] %vm1486, %v1435
        %1489 = vst.msk [vmem:[#allocation3 + $0x8] sm:$0xf] %vm1486, %v1437
        %1490 = vst.msk [vmem:[#allocation3 + $0xc] sm:$0xf] %vm1486, %v1439
        %1491 = vst.msk [vmem:[#allocation3 + $0x10] sm:$0xf] %vm1486, %v1441
        %1492 = vst.msk [vmem:[#allocation3 + $0x14] sm:$0xf] %vm1486, %v1443
        %1493 = vst.msk [vmem:[#allocation3 + $0x18] sm:$0xf] %vm1486, %v1445
        %1494 = vst.msk [vmem:[#allocation3 + $0x1c] sm:$0xf] %vm1486, %v1447
        %1495 = vst.msk [vmem:[#allocation3 + $0x20] sm:$0xf] %vm1486, %v1449
        %1496 = vst.msk [vmem:[#allocation3 + $0x24] sm:$0xf] %vm1486, %v1451
        %1497 = vst.msk [vmem:[#allocation3 + $0x28] sm:$0xf] %vm1486, %v1453
        %1498 = vst.msk [vmem:[#allocation3 + $0x2c] sm:$0xf] %vm1486, %v1455
        %1499 = vst.msk [vmem:[#allocation3 + $0x30] sm:$0xf] %vm1486, %v1457
        %1500 = vst.msk [vmem:[#allocation3 + $0x34] sm:$0xf] %vm1486, %v1459
        %1501 = vst.msk [vmem:[#allocation3 + $0x38] sm:$0xf] %vm1486, %v1461
        %1502 = vst.msk [vmem:[#allocation3 + $0x3c] sm:$0xf] %vm1486, %v1463
        %1503 = vst.msk [vmem:[#allocation3 + $0x40] sm:$0xf] %vm1486, %v1465
        %1504 = vst.msk [vmem:[#allocation3 + $0x44] sm:$0xf] %vm1486, %v1467
        %v1505 = vld [vmem:[#allocation2 + $0x10] sm:$0xc]
        %v1506 = vld [vmem:[#allocation2 + $0x14] sm:$0xf]
        %v1507 = vld [vmem:[#allocation2 + $0x18] sm:$0xf]
        %v1508 = vld [vmem:[#allocation2 + $0x1c] sm:$0xf]
        %v1509 = vld [vmem:[#allocation2 + $0x20] sm:$0xf]
        %v1510 = vld [vmem:[#allocation2 + $0x24] sm:$0xf]
        %v1511 = vld [vmem:[#allocation2 + $0x28] sm:$0xf]
        %v1512 = vld [vmem:[#allocation2 + $0x2c] sm:$0xf]
        %v1513 = vld [vmem:[#allocation2 + $0x30] sm:$0xf]
        %v1514 = vld [vmem:[#allocation2 + $0x34] sm:$0xf]
        %v1515 = vld [vmem:[#allocation2 + $0x38] sm:$0xf]
        %v1516 = vld [vmem:[#allocation2 + $0x3c] sm:$0xf]
        %v1517 = vld [vmem:[#allocation2 + $0x40] sm:$0xf]
        %v1518 = vld [vmem:[#allocation2 + $0x44] sm:$0xf]
        %v1519 = vld [vmem:[#allocation2 + $0x48] sm:$0xf]
        %v1520 = vld [vmem:[#allocation2 + $0x4c] sm:$0xf]
        %v1521 = vld [vmem:[#allocation2 + $0x50] sm:$0xf]
        %v1522 = vld [vmem:[#allocation2 + $0x54] sm:$0xf]
        %v1523 = vld [vmem:[#allocation2 + $0x58] sm:$0x3]
        %v1543 = vrot.slane %v1505, 6
        %v1544 = vrot.slane %v1543, 4
        %v1545 = vrot.slane %v1506, 6
        %v1546 = vsel %vm1376, %v1544, %v1545
        %v1547 = vrot.slane %v1545, 4
        %v1548 = vrot.slane %v1507, 6
        %v1549 = vsel %vm1376, %v1547, %v1548
        %v1550 = vrot.slane %v1548, 4
        %v1551 = vrot.slane %v1508, 6
        %v1552 = vsel %vm1376, %v1550, %v1551
        %v1553 = vrot.slane %v1551, 4
        %v1554 = vrot.slane %v1509, 6
        %v1555 = vsel %vm1376, %v1553, %v1554
        %v1556 = vrot.slane %v1554, 4
        %v1557 = vrot.slane %v1510, 6
        %v1558 = vsel %vm1376, %v1556, %v1557
        %v1559 = vrot.slane %v1557, 4
        %v1560 = vrot.slane %v1511, 6
        %v1561 = vsel %vm1376, %v1559, %v1560
        %v1562 = vrot.slane %v1560, 4
        %v1563 = vrot.slane %v1512, 6
        %v1564 = vsel %vm1376, %v1562, %v1563
        %v1565 = vrot.slane %v1563, 4
        %v1566 = vrot.slane %v1513, 6
        %v1567 = vsel %vm1376, %v1565, %v1566
        %v1568 = vrot.slane %v1566, 4
        %v1569 = vrot.slane %v1514, 6
        %v1570 = vsel %vm1376, %v1568, %v1569
        %v1571 = vrot.slane %v1569, 4
        %v1572 = vrot.slane %v1515, 6
        %v1573 = vsel %vm1376, %v1571, %v1572
        %v1574 = vrot.slane %v1572, 4
        %v1575 = vrot.slane %v1516, 6
        %v1576 = vsel %vm1376, %v1574, %v1575
        %v1577 = vrot.slane %v1575, 4
        %v1578 = vrot.slane %v1517, 6
        %v1579 = vsel %vm1376, %v1577, %v1578
        %v1580 = vrot.slane %v1578, 4
        %v1581 = vrot.slane %v1518, 6
        %v1582 = vsel %vm1376, %v1580, %v1581
        %v1583 = vrot.slane %v1581, 4
        %v1584 = vrot.slane %v1519, 6
        %v1585 = vsel %vm1376, %v1583, %v1584
        %v1586 = vrot.slane %v1584, 4
        %v1587 = vrot.slane %v1520, 6
        %v1588 = vsel %vm1376, %v1586, %v1587
        %v1589 = vrot.slane %v1587, 4
        %v1590 = vrot.slane %v1521, 6
        %v1591 = vsel %vm1376, %v1589, %v1590
        %v1592 = vrot.slane %v1590, 4
        %v1593 = vrot.slane %v1522, 6
        %v1594 = vsel %vm1376, %v1592, %v1593
        %v1595 = vrot.slane %v1593, 4
        %v1596 = vrot.slane %v1523, 6
        %v1597 = vsel %vm1376, %v1595, %v1596
        %1598 = vrot.lane.b32.xlu0 %v1546, 48
        %v1599 = vpop.permute.xlu0 %1598
        %1600 = vrot.lane.b32.xlu0 %v1549, 48
        %v1601 = vpop.permute.xlu0 %1600
        %1602 = vrot.lane.b32.xlu0 %v1552, 48
        %v1603 = vpop.permute.xlu0 %1602
        %1604 = vrot.lane.b32.xlu0 %v1555, 48
        %v1605 = vpop.permute.xlu0 %1604
        %1606 = vrot.lane.b32.xlu0 %v1558, 48
        %v1607 = vpop.permute.xlu0 %1606
        %1608 = vrot.lane.b32.xlu0 %v1561, 48
        %v1609 = vpop.permute.xlu0 %1608
        %1610 = vrot.lane.b32.xlu0 %v1564, 48
        %v1611 = vpop.permute.xlu0 %1610
        %1612 = vrot.lane.b32.xlu0 %v1567, 48
        %v1613 = vpop.permute.xlu0 %1612
        %1614 = vrot.lane.b32.xlu0 %v1570, 48
        %v1615 = vpop.permute.xlu0 %1614
        %1616 = vrot.lane.b32.xlu0 %v1573, 48
        %v1617 = vpop.permute.xlu0 %1616
        %1618 = vrot.lane.b32.xlu0 %v1576, 48
        %v1619 = vpop.permute.xlu0 %1618
        %1620 = vrot.lane.b32.xlu0 %v1579, 48
        %v1621 = vpop.permute.xlu0 %1620
        %1622 = vrot.lane.b32.xlu0 %v1582, 48
        %v1623 = vpop.permute.xlu0 %1622
        %1624 = vrot.lane.b32.xlu0 %v1585, 48
        %v1625 = vpop.permute.xlu0 %1624
        %1626 = vrot.lane.b32.xlu0 %v1588, 48
        %v1627 = vpop.permute.xlu0 %1626
        %1628 = vrot.lane.b32.xlu0 %v1591, 48
        %v1629 = vpop.permute.xlu0 %1628
        %1630 = vrot.lane.b32.xlu0 %v1594, 48
        %v1631 = vpop.permute.xlu0 %1630
        %1632 = vrot.lane.b32.xlu0 %v1597, 48
        %v1633 = vpop.permute.xlu0 %1632
        %vm1652 = vcmask 454016
        %1653 = vst.msk [vmem:[#allocation3] sm:$0xf] %vm1652, %v1599
        %1654 = vst.msk [vmem:[#allocation3 + $0x4] sm:$0xf] %vm1652, %v1601
        %1655 = vst.msk [vmem:[#allocation3 + $0x8] sm:$0xf] %vm1652, %v1603
        %1656 = vst.msk [vmem:[#allocation3 + $0xc] sm:$0xf] %vm1652, %v1605
        %1657 = vst.msk [vmem:[#allocation3 + $0x10] sm:$0xf] %vm1652, %v1607
        %1658 = vst.msk [vmem:[#allocation3 + $0x14] sm:$0xf] %vm1652, %v1609
        %1659 = vst.msk [vmem:[#allocation3 + $0x18] sm:$0xf] %vm1652, %v1611
        %1660 = vst.msk [vmem:[#allocation3 + $0x1c] sm:$0xf] %vm1652, %v1613
        %1661 = vst.msk [vmem:[#allocation3 + $0x20] sm:$0xf] %vm1652, %v1615
        %1662 = vst.msk [vmem:[#allocation3 + $0x24] sm:$0xf] %vm1652, %v1617
        %1663 = vst.msk [vmem:[#allocation3 + $0x28] sm:$0xf] %vm1652, %v1619
        %1664 = vst.msk [vmem:[#allocation3 + $0x2c] sm:$0xf] %vm1652, %v1621
        %1665 = vst.msk [vmem:[#allocation3 + $0x30] sm:$0xf] %vm1652, %v1623
        %1666 = vst.msk [vmem:[#allocation3 + $0x34] sm:$0xf] %vm1652, %v1625
        %1667 = vst.msk [vmem:[#allocation3 + $0x38] sm:$0xf] %vm1652, %v1627
        %1668 = vst.msk [vmem:[#allocation3 + $0x3c] sm:$0xf] %vm1652, %v1629
        %1669 = vst.msk [vmem:[#allocation3 + $0x40] sm:$0xf] %vm1652, %v1631
        %1670 = vst.msk [vmem:[#allocation3 + $0x44] sm:$0xf] %vm1652, %v1633
        %v1671 = vld [vmem:[#allocation2 + $0x10] sm:$0xc]
        %v1672 = vld [vmem:[#allocation2 + $0x14] sm:$0xf]
        %v1673 = vld [vmem:[#allocation2 + $0x18] sm:$0xf]
        %v1674 = vld [vmem:[#allocation2 + $0x1c] sm:$0xf]
        %v1675 = vld [vmem:[#allocation2 + $0x20] sm:$0xf]
        %v1676 = vld [vmem:[#allocation2 + $0x24] sm:$0xf]
        %v1677 = vld [vmem:[#allocation2 + $0x28] sm:$0xf]
        %v1678 = vld [vmem:[#allocation2 + $0x2c] sm:$0xf]
        %v1679 = vld [vmem:[#allocation2 + $0x30] sm:$0xf]
        %v1680 = vld [vmem:[#allocation2 + $0x34] sm:$0xf]
        %v1681 = vld [vmem:[#allocation2 + $0x38] sm:$0xf]
        %v1682 = vld [vmem:[#allocation2 + $0x3c] sm:$0xf]
        %v1683 = vld [vmem:[#allocation2 + $0x40] sm:$0xf]
        %v1684 = vld [vmem:[#allocation2 + $0x44] sm:$0xf]
        %v1685 = vld [vmem:[#allocation2 + $0x48] sm:$0xf]
        %v1686 = vld [vmem:[#allocation2 + $0x4c] sm:$0xf]
        %v1687 = vld [vmem:[#allocation2 + $0x50] sm:$0xf]
        %v1688 = vld [vmem:[#allocation2 + $0x54] sm:$0xf]
        %v1689 = vld [vmem:[#allocation2 + $0x58] sm:$0x7]
        %vm1690 = vsmask.f32 1280
        %vm1691 = vsmask.f32 5392
        %vm1692 = vmor %vm1690, %vm1691
        %v1694 = vshrl.u32 %v1671, 16
        %v1696 = vrot.slane %v1694, 6
        %v1697 = vshll.u32 %v1671, 16
        %v1699 = vrot.slane %v1697, 7
        %v1700 = vor.u32 %v1696, %v1699
        %v1701 = vrot.slane %v1700, 4
        %v1703 = vshrl.u32 %v1672, 16
        %v1705 = vrot.slane %v1703, 6
        %v1706 = vshll.u32 %v1672, 16
        %v1708 = vrot.slane %v1706, 7
        %v1709 = vor.u32 %v1705, %v1708
        %v1710 = vsel %vm1692, %v1701, %v1709
        %v1711 = vrot.slane %v1709, 4
        %v1713 = vshrl.u32 %v1673, 16
        %v1715 = vrot.slane %v1713, 6
        %v1716 = vshll.u32 %v1673, 16
        %v1718 = vrot.slane %v1716, 7
        %v1719 = vor.u32 %v1715, %v1718
        %v1720 = vsel %vm1692, %v1711, %v1719
        %v1721 = vrot.slane %v1719, 4
        %v1723 = vshrl.u32 %v1674, 16
        %v1725 = vrot.slane %v1723, 6
        %v1726 = vshll.u32 %v1674, 16
        %v1728 = vrot.slane %v1726, 7
        %v1729 = vor.u32 %v1725, %v1728
        %v1730 = vsel %vm1692, %v1721, %v1729
        %v1731 = vrot.slane %v1729, 4
        %v1733 = vshrl.u32 %v1675, 16
        %v1735 = vrot.slane %v1733, 6
        %v1736 = vshll.u32 %v1675, 16
        %v1738 = vrot.slane %v1736, 7
        %v1739 = vor.u32 %v1735, %v1738
        %v1740 = vsel %vm1692, %v1731, %v1739
        %v1741 = vrot.slane %v1739, 4
        %v1743 = vshrl.u32 %v1676, 16
        %v1745 = vrot.slane %v1743, 6
        %v1746 = vshll.u32 %v1676, 16
        %v1748 = vrot.slane %v1746, 7
        %v1749 = vor.u32 %v1745, %v1748
        %v1750 = vsel %vm1692, %v1741, %v1749
        %v1751 = vrot.slane %v1749, 4
        %v1753 = vshrl.u32 %v1677, 16
        %v1755 = vrot.slane %v1753, 6
        %v1756 = vshll.u32 %v1677, 16
        %v1758 = vrot.slane %v1756, 7
        %v1759 = vor.u32 %v1755, %v1758
        %v1760 = vsel %vm1692, %v1751, %v1759
        %v1761 = vrot.slane %v1759, 4
        %v1763 = vshrl.u32 %v1678, 16
        %v1765 = vrot.slane %v1763, 6
        %v1766 = vshll.u32 %v1678, 16
        %v1768 = vrot.slane %v1766, 7
        %v1769 = vor.u32 %v1765, %v1768
        %v1770 = vsel %vm1692, %v1761, %v1769
        %v1771 = vrot.slane %v1769, 4
        %v1773 = vshrl.u32 %v1679, 16
        %v1775 = vrot.slane %v1773, 6
        %v1776 = vshll.u32 %v1679, 16
        %v1778 = vrot.slane %v1776, 7
        %v1779 = vor.u32 %v1775, %v1778
        %v1780 = vsel %vm1692, %v1771, %v1779
        %v1781 = vrot.slane %v1779, 4
        %v1783 = vshrl.u32 %v1680, 16
        %v1785 = vrot.slane %v1783, 6
        %v1786 = vshll.u32 %v1680, 16
        %v1788 = vrot.slane %v1786, 7
        %v1789 = vor.u32 %v1785, %v1788
        %v1790 = vsel %vm1692, %v1781, %v1789
        %v1791 = vrot.slane %v1789, 4
        %v1793 = vshrl.u32 %v1681, 16
        %v1795 = vrot.slane %v1793, 6
        %v1796 = vshll.u32 %v1681, 16
        %v1798 = vrot.slane %v1796, 7
        %v1799 = vor.u32 %v1795, %v1798
        %v1800 = vsel %vm1692, %v1791, %v1799
        %v1801 = vrot.slane %v1799, 4
        %v1803 = vshrl.u32 %v1682, 16
        %v1805 = vrot.slane %v1803, 6
        %v1806 = vshll.u32 %v1682, 16
        %v1808 = vrot.slane %v1806, 7
        %v1809 = vor.u32 %v1805, %v1808
        %v1810 = vsel %vm1692, %v1801, %v1809
        %v1811 = vrot.slane %v1809, 4
        %v1813 = vshrl.u32 %v1683, 16
        %v1815 = vrot.slane %v1813, 6
        %v1816 = vshll.u32 %v1683, 16
        %v1818 = vrot.slane %v1816, 7
        %v1819 = vor.u32 %v1815, %v1818
        %v1820 = vsel %vm1692, %v1811, %v1819
        %v1821 = vrot.slane %v1819, 4
        %v1823 = vshrl.u32 %v1684, 16
        %v1825 = vrot.slane %v1823, 6
        %v1826 = vshll.u32 %v1684, 16
        %v1828 = vrot.slane %v1826, 7
        %v1829 = vor.u32 %v1825, %v1828
        %v1830 = vsel %vm1692, %v1821, %v1829
        %v1831 = vrot.slane %v1829, 4
        %v1833 = vshrl.u32 %v1685, 16
        %v1835 = vrot.slane %v1833, 6
        %v1836 = vshll.u32 %v1685, 16
        %v1838 = vrot.slane %v1836, 7
        %v1839 = vor.u32 %v1835, %v1838
        %v1840 = vsel %vm1692, %v1831, %v1839
        %v1841 = vrot.slane %v1839, 4
        %v1843 = vshrl.u32 %v1686, 16
        %v1845 = vrot.slane %v1843, 6
        %v1846 = vshll.u32 %v1686, 16
        %v1848 = vrot.slane %v1846, 7
        %v1849 = vor.u32 %v1845, %v1848
        %v1850 = vsel %vm1692, %v1841, %v1849
        %v1851 = vrot.slane %v1849, 4
        %v1853 = vshrl.u32 %v1687, 16
        %v1855 = vrot.slane %v1853, 6
        %v1856 = vshll.u32 %v1687, 16
        %v1858 = vrot.slane %v1856, 7
        %v1859 = vor.u32 %v1855, %v1858
        %v1860 = vsel %vm1692, %v1851, %v1859
        %v1861 = vrot.slane %v1859, 4
        %v1863 = vshrl.u32 %v1688, 16
        %v1865 = vrot.slane %v1863, 6
        %v1866 = vshll.u32 %v1688, 16
        %v1868 = vrot.slane %v1866, 7
        %v1869 = vor.u32 %v1865, %v1868
        %v1870 = vsel %vm1692, %v1861, %v1869
        %v1871 = vrot.slane %v1869, 4
        %v1873 = vshrl.u32 %v1689, 16
        %v1875 = vrot.slane %v1873, 6
        %v1876 = vshll.u32 %v1689, 16
        %v1878 = vrot.slane %v1876, 7
        %v1879 = vor.u32 %v1875, %v1878
        %v1880 = vsel %vm1692, %v1871, %v1879
        %1881 = vrot.lane.b32.xlu0 %v1710, 56
        %v1882 = vpop.permute.xlu0 %1881
        %1883 = vrot.lane.b32.xlu0 %v1720, 56
        %v1884 = vpop.permute.xlu0 %1883
        %1885 = vrot.lane.b32.xlu0 %v1730, 56
        %v1886 = vpop.permute.xlu0 %1885
        %1887 = vrot.lane.b32.xlu0 %v1740, 56
        %v1888 = vpop.permute.xlu0 %1887
        %1889 = vrot.lane.b32.xlu0 %v1750, 56
        %v1890 = vpop.permute.xlu0 %1889
        %1891 = vrot.lane.b32.xlu0 %v1760, 56
        %v1892 = vpop.permute.xlu0 %1891
        %1893 = vrot.lane.b32.xlu0 %v1770, 56
        %v1894 = vpop.permute.xlu0 %1893
        %1895 = vrot.lane.b32.xlu0 %v1780, 56
        %v1896 = vpop.permute.xlu0 %1895
        %1897 = vrot.lane.b32.xlu0 %v1790, 56
        %v1898 = vpop.permute.xlu0 %1897
        %1899 = vrot.lane.b32.xlu0 %v1800, 56
        %v1900 = vpop.permute.xlu0 %1899
        %1901 = vrot.lane.b32.xlu0 %v1810, 56
        %v1902 = vpop.permute.xlu0 %1901
        %1903 = vrot.lane.b32.xlu0 %v1820, 56
        %v1904 = vpop.permute.xlu0 %1903
        %1905 = vrot.lane.b32.xlu0 %v1830, 56
        %v1906 = vpop.permute.xlu0 %1905
        %1907 = vrot.lane.b32.xlu0 %v1840, 56
        %v1908 = vpop.permute.xlu0 %1907
        %1909 = vrot.lane.b32.xlu0 %v1850, 56
        %v1910 = vpop.permute.xlu0 %1909
        %1911 = vrot.lane.b32.xlu0 %v1860, 56
        %v1912 = vpop.permute.xlu0 %1911
        %1913 = vrot.lane.b32.xlu0 %v1870, 56
        %v1914 = vpop.permute.xlu0 %1913
        %1915 = vrot.lane.b32.xlu0 %v1880, 56
        %v1916 = vpop.permute.xlu0 %1915
        %vm1935 = vcmask 519616
        %1936 = vst.msk [vmem:[#allocation3] sm:$0xf] %vm1935, %v1882
        %1937 = vst.msk [vmem:[#allocation3 + $0x4] sm:$0xf] %vm1935, %v1884
        %1938 = vst.msk [vmem:[#allocation3 + $0x8] sm:$0xf] %vm1935, %v1886
        %1939 = vst.msk [vmem:[#allocation3 + $0xc] sm:$0xf] %vm1935, %v1888
        %1940 = vst.msk [vmem:[#allocation3 + $0x10] sm:$0xf] %vm1935, %v1890
        %1941 = vst.msk [vmem:[#allocation3 + $0x14] sm:$0xf] %vm1935, %v1892
        %1942 = vst.msk [vmem:[#allocation3 + $0x18] sm:$0xf] %vm1935, %v1894
        %1943 = vst.msk [vmem:[#allocation3 + $0x1c] sm:$0xf] %vm1935, %v1896
        %1944 = vst.msk [vmem:[#allocation3 + $0x20] sm:$0xf] %vm1935, %v1898
        %1945 = vst.msk [vmem:[#allocation3 + $0x24] sm:$0xf] %vm1935, %v1900
        %1946 = vst.msk [vmem:[#allocation3 + $0x28] sm:$0xf] %vm1935, %v1902
        %1947 = vst.msk [vmem:[#allocation3 + $0x2c] sm:$0xf] %vm1935, %v1904
        %1948 = vst.msk [vmem:[#allocation3 + $0x30] sm:$0xf] %vm1935, %v1906
        %1949 = vst.msk [vmem:[#allocation3 + $0x34] sm:$0xf] %vm1935, %v1908
        %1950 = vst.msk [vmem:[#allocation3 + $0x38] sm:$0xf] %vm1935, %v1910
        %1951 = vst.msk [vmem:[#allocation3 + $0x3c] sm:$0xf] %vm1935, %v1912
        %1952 = vst.msk [vmem:[#allocation3 + $0x40] sm:$0xf] %vm1935, %v1914
        %1953 = vst.msk [vmem:[#allocation3 + $0x44] sm:$0xf] %vm1935, %v1916
        %v1954 = vld [vmem:[#allocation2 + $0x10] sm:$0x8]
        %v1955 = vld [vmem:[#allocation2 + $0x14] sm:$0xf]
        %v1956 = vld [vmem:[#allocation2 + $0x18] sm:$0xf]
        %v1957 = vld [vmem:[#allocation2 + $0x1c] sm:$0xf]
        %v1958 = vld [vmem:[#allocation2 + $0x20] sm:$0xf]
        %v1959 = vld [vmem:[#allocation2 + $0x24] sm:$0xf]
        %v1960 = vld [vmem:[#allocation2 + $0x28] sm:$0xf]
        %v1961 = vld [vmem:[#allocation2 + $0x2c] sm:$0xf]
        %v1962 = vld [vmem:[#allocation2 + $0x30] sm:$0xf]
        %v1963 = vld [vmem:[#allocation2 + $0x34] sm:$0xf]
        %v1964 = vld [vmem:[#allocation2 + $0x38] sm:$0xf]
        %v1965 = vld [vmem:[#allocation2 + $0x3c] sm:$0xf]
        %v1966 = vld [vmem:[#allocation2 + $0x40] sm:$0xf]
        %v1967 = vld [vmem:[#allocation2 + $0x44] sm:$0xf]
        %v1968 = vld [vmem:[#allocation2 + $0x48] sm:$0xf]
        %v1969 = vld [vmem:[#allocation2 + $0x4c] sm:$0xf]
        %v1970 = vld [vmem:[#allocation2 + $0x50] sm:$0xf]
        %v1971 = vld [vmem:[#allocation2 + $0x54] sm:$0xf]
        %v1972 = vld [vmem:[#allocation2 + $0x58] sm:$0x7]
        %vm1992 = vcmask 1040384
        %vm1993 = vcmask 1044484
        %vm1994 = vmor %vm1992, %vm1993
        %v1995 = vrot.slane %v1954, 7
        %v1996 = vrot.slane %v1995, 4
        %v1997 = vrot.slane %v1955, 7
        %v1998 = vsel %vm1994, %v1996, %v1997
        %v1999 = vrot.slane %v1997, 4
        %v2000 = vrot.slane %v1956, 7
        %v2001 = vsel %vm1994, %v1999, %v2000
        %v2002 = vrot.slane %v2000, 4
        %v2003 = vrot.slane %v1957, 7
        %v2004 = vsel %vm1994, %v2002, %v2003
        %v2005 = vrot.slane %v2003, 4
        %v2006 = vrot.slane %v1958, 7
        %v2007 = vsel %vm1994, %v2005, %v2006
        %v2008 = vrot.slane %v2006, 4
        %v2009 = vrot.slane %v1959, 7
        %v2010 = vsel %vm1994, %v2008, %v2009
        %v2011 = vrot.slane %v2009, 4
        %v2012 = vrot.slane %v1960, 7
        %v2013 = vsel %vm1994, %v2011, %v2012
        %v2014 = vrot.slane %v2012, 4
        %v2015 = vrot.slane %v1961, 7
        %v2016 = vsel %vm1994, %v2014, %v2015
        %v2017 = vrot.slane %v2015, 4
        %v2018 = vrot.slane %v1962, 7
        %v2019 = vsel %vm1994, %v2017, %v2018
        %v2020 = vrot.slane %v2018, 4
        %v2021 = vrot.slane %v1963, 7
        %v2022 = vsel %vm1994, %v2020, %v2021
        %v2023 = vrot.slane %v2021, 4
        %v2024 = vrot.slane %v1964, 7
        %v2025 = vsel %vm1994, %v2023, %v2024
        %v2026 = vrot.slane %v2024, 4
        %v2027 = vrot.slane %v1965, 7
        %v2028 = vsel %vm1994, %v2026, %v2027
        %v2029 = vrot.slane %v2027, 4
        %v2030 = vrot.slane %v1966, 7
        %v2031 = vsel %vm1994, %v2029, %v2030
        %v2032 = vrot.slane %v2030, 4
        %v2033 = vrot.slane %v1967, 7
        %v2034 = vsel %vm1994, %v2032, %v2033
        %v2035 = vrot.slane %v2033, 4
        %v2036 = vrot.slane %v1968, 7
        %v2037 = vsel %vm1994, %v2035, %v2036
        %v2038 = vrot.slane %v2036, 4
        %v2039 = vrot.slane %v1969, 7
        %v2040 = vsel %vm1994, %v2038, %v2039
        %v2041 = vrot.slane %v2039, 4
        %v2042 = vrot.slane %v1970, 7
        %v2043 = vsel %vm1994, %v2041, %v2042
        %v2044 = vrot.slane %v2042, 4
        %v2045 = vrot.slane %v1971, 7
        %v2046 = vsel %vm1994, %v2044, %v2045
        %v2047 = vrot.slane %v2045, 4
        %v2048 = vrot.slane %v1972, 7
        %v2049 = vsel %vm1994, %v2047, %v2048
        %2050 = vrot.lane.b32.xlu0 %v1998, 64
        %v2051 = vpop.permute.xlu0 %2050
        %2052 = vrot.lane.b32.xlu0 %v2001, 64
        %v2053 = vpop.permute.xlu0 %2052
        %2054 = vrot.lane.b32.xlu0 %v2004, 64
        %v2055 = vpop.permute.xlu0 %2054
        %2056 = vrot.lane.b32.xlu0 %v2007, 64
        %v2057 = vpop.permute.xlu0 %2056
        %2058 = vrot.lane.b32.xlu0 %v2010, 64
        %v2059 = vpop.permute.xlu0 %2058
        %2060 = vrot.lane.b32.xlu0 %v2013, 64
        %v2061 = vpop.permute.xlu0 %2060
        %2062 = vrot.lane.b32.xlu0 %v2016, 64
        %v2063 = vpop.permute.xlu0 %2062
        %2064 = vrot.lane.b32.xlu0 %v2019, 64
        %v2065 = vpop.permute.xlu0 %2064
        %2066 = vrot.lane.b32.xlu0 %v2022, 64
        %v2067 = vpop.permute.xlu0 %2066
        %2068 = vrot.lane.b32.xlu0 %v2025, 64
        %v2069 = vpop.permute.xlu0 %2068
        %2070 = vrot.lane.b32.xlu0 %v2028, 64
        %v2071 = vpop.permute.xlu0 %2070
        %2072 = vrot.lane.b32.xlu0 %v2031, 64
        %v2073 = vpop.permute.xlu0 %2072
        %2074 = vrot.lane.b32.xlu0 %v2034, 64
        %v2075 = vpop.permute.xlu0 %2074
        %2076 = vrot.lane.b32.xlu0 %v2037, 64
        %v2077 = vpop.permute.xlu0 %2076
        %2078 = vrot.lane.b32.xlu0 %v2040, 64
        %v2079 = vpop.permute.xlu0 %2078
        %2080 = vrot.lane.b32.xlu0 %v2043, 64
        %v2081 = vpop.permute.xlu0 %2080
        %2082 = vrot.lane.b32.xlu0 %v2046, 64
        %v2083 = vpop.permute.xlu0 %2082
        %2084 = vrot.lane.b32.xlu0 %v2049, 64
        %v2085 = vpop.permute.xlu0 %2084
        %vm2104 = vcmask 585216
        %2105 = vst.msk [vmem:[#allocation3] sm:$0xf] %vm2104, %v2051
        %2106 = vst.msk [vmem:[#allocation3 + $0x4] sm:$0xf] %vm2104, %v2053
        %2107 = vst.msk [vmem:[#allocation3 + $0x8] sm:$0xf] %vm2104, %v2055
        %2108 = vst.msk [vmem:[#allocation3 + $0xc] sm:$0xf] %vm2104, %v2057
        %2109 = vst.msk [vmem:[#allocation3 + $0x10] sm:$0xf] %vm2104, %v2059
        %2110 = vst.msk [vmem:[#allocation3 + $0x14] sm:$0xf] %vm2104, %v2061
        %2111 = vst.msk [vmem:[#allocation3 + $0x18] sm:$0xf] %vm2104, %v2063
        %2112 = vst.msk [vmem:[#allocation3 + $0x1c] sm:$0xf] %vm2104, %v2065
        %2113 = vst.msk [vmem:[#allocation3 + $0x20] sm:$0xf] %vm2104, %v2067
        %2114 = vst.msk [vmem:[#allocation3 + $0x24] sm:$0xf] %vm2104, %v2069
        %2115 = vst.msk [vmem:[#allocation3 + $0x28] sm:$0xf] %vm2104, %v2071
        %2116 = vst.msk [vmem:[#allocation3 + $0x2c] sm:$0xf] %vm2104, %v2073
        %2117 = vst.msk [vmem:[#allocation3 + $0x30] sm:$0xf] %vm2104, %v2075
        %2118 = vst.msk [vmem:[#allocation3 + $0x34] sm:$0xf] %vm2104, %v2077
        %2119 = vst.msk [vmem:[#allocation3 + $0x38] sm:$0xf] %vm2104, %v2079
        %2120 = vst.msk [vmem:[#allocation3 + $0x3c] sm:$0xf] %vm2104, %v2081
        %2121 = vst.msk [vmem:[#allocation3 + $0x40] sm:$0xf] %vm2104, %v2083
        %2122 = vst.msk [vmem:[#allocation3 + $0x44] sm:$0xf] %vm2104, %v2085
        %v2123 = vld [vmem:[#allocation3] sm:$0xf]
        %v2124 = vld [vmem:[#allocation3 + $0x4] sm:$0xf]
        %v2125 = vld [vmem:[#allocation3 + $0x8] sm:$0xf]
        %v2126 = vld [vmem:[#allocation3 + $0xc] sm:$0xf]
        %v2127 = vld [vmem:[#allocation3 + $0x10] sm:$0xf]
        %v2128 = vld [vmem:[#allocation3 + $0x14] sm:$0xf]
        %v2129 = vld [vmem:[#allocation3 + $0x18] sm:$0xf]
        %v2130 = vld [vmem:[#allocation3 + $0x1c] sm:$0xf]
        %v2131 = vld [vmem:[#allocation3 + $0x20] sm:$0xf]
        %v2132 = vld [vmem:[#allocation3 + $0x24] sm:$0xf]
        %v2133 = vld [vmem:[#allocation3 + $0x28] sm:$0xf]
        %v2134 = vld [vmem:[#allocation3 + $0x2c] sm:$0xf]
        %v2135 = vld [vmem:[#allocation3 + $0x30] sm:$0xf]
        %v2136 = vld [vmem:[#allocation3 + $0x34] sm:$0xf]
        %v2137 = vld [vmem:[#allocation3 + $0x38] sm:$0xf]
        %v2138 = vld [vmem:[#allocation3 + $0x3c] sm:$0xf]
        %v2139 = vld [vmem:[#allocation3 + $0x40] sm:$0xf]
        %v2140 = vld [vmem:[#allocation3 + $0x44] sm:$0xf]
        %v2141 = vld [vmem:[%s2] sm:$0xf]
        %v2142 = vld [vmem:[%s2 + $0x4] sm:$0xf]
        %v2143 = vld [vmem:[%s2 + $0x8] sm:$0xf]
        %v2144 = vld [vmem:[%s2 + $0xc] sm:$0xf]
        %v2145 = vld [vmem:[%s2 + $0x10] sm:$0xf]
        %v2146 = vld [vmem:[%s2 + $0x14] sm:$0xf]
        %v2147 = vld [vmem:[%s2 + $0x18] sm:$0xf]
        %v2148 = vld [vmem:[%s2 + $0x1c] sm:$0xf]
        %v2149 = vld [vmem:[%s2 + $0x20] sm:$0xf]
        %v2168 = vunpack.c.l.b16 %v2123
        %v2169 = vunpack.c.l.b16 %v2124
        %v2170 = vunpack.c.l.b16 %v2125
        %v2171 = vunpack.c.l.b16 %v2126
        %v2172 = vunpack.c.l.b16 %v2127
        %v2173 = vunpack.c.l.b16 %v2128
        %v2174 = vunpack.c.l.b16 %v2129
        %v2175 = vunpack.c.l.b16 %v2130
        %v2176 = vunpack.c.l.b16 %v2131
        %v2177 = vunpack.c.l.b16 %v2132
        %v2178 = vunpack.c.l.b16 %v2133
        %v2179 = vunpack.c.l.b16 %v2134
        %v2180 = vunpack.c.l.b16 %v2135
        %v2181 = vunpack.c.l.b16 %v2136
        %v2182 = vunpack.c.l.b16 %v2137
        %v2183 = vunpack.c.l.b16 %v2138
        %v2184 = vunpack.c.l.b16 %v2139
        %v2185 = vunpack.c.l.b16 %v2140
        %v2186 = vpack.c.b16 %v2169, %v2168
        %v2187 = vpack.c.b16 %v2171, %v2170
        %v2188 = vpack.c.b16 %v2173, %v2172
        %v2189 = vpack.c.b16 %v2175, %v2174
        %v2190 = vpack.c.b16 %v2177, %v2176
        %v2191 = vpack.c.b16 %v2179, %v2178
        %v2192 = vpack.c.b16 %v2181, %v2180
        %v2193 = vpack.c.b16 %v2183, %v2182
        %v2194 = vpack.c.b16 %v2185, %v2184
        %v2204 = vunpack.c.l.b16 %v2141
        %v2205 = vunpack.c.l.b16 %v2142
        %v2206 = vunpack.c.l.b16 %v2143
        %v2207 = vunpack.c.l.b16 %v2144
        %v2208 = vunpack.c.l.b16 %v2145
        %v2209 = vunpack.c.l.b16 %v2146
        %v2210 = vunpack.c.l.b16 %v2147
        %v2211 = vunpack.c.l.b16 %v2148
        %v2212 = vunpack.c.l.b16 %v2149
        %v2213 = vpack.c.b16 %v2205, %v2204
        %v2214 = vpack.c.b16 %v2207, %v2206
        %v2215 = vpack.c.b16 %v2209, %v2208
        %v2216 = vpack.c.b16 %v2211, %v2210
        %v2217 = vpack.c.b16 %v2212, %v2212
        %vm2222 = vcmask 588800
        %v2224 = vsel %vm2222, %v2186, 0
        %v2227 = vsel %vm2222, %v2187, 0
        %v2230 = vsel %vm2222, %v2188, 0
        %v2233 = vsel %vm2222, %v2189, 0
        %v2236 = vsel %vm2222, %v2190, 0
        %v2239 = vsel %vm2222, %v2191, 0
        %v2242 = vsel %vm2222, %v2192, 0
        %v2245 = vsel %vm2222, %v2193, 0
        %v2248 = vsel %vm2222, %v2194, 0
        %vm2250 = vcmask 1043456
        %v2252 = vsel %vm2250, %v2217, 0
        %2254 = vmatpush.bf16.msra.mxu0 0
        %2255 = vmatpush.bf16.msra.mxu0 0
        %2256 = vmatpush.bf16.msra.mxu0 0
        %2257 = vmatpush.bf16.msra.mxu0 %v2252
        %2258 = vmatpush.bf16.msra.mxu0 %v2216
        %2259 = vmatpush.bf16.msra.mxu0 %v2215
        %2260 = vmatpush.bf16.msra.mxu0 %v2214
        %2261 = vmatpush.bf16.msra.mxu0 %v2213
        %2262 = vmatmul.bf16.gmra.mxu0 %v2224
        %v2263 = vpop.f32.mrf.mxu0
        %v2264 = vadd.f32 0.0, %v2263
        %v2265 = vpop.f32.mrf.mxu0
        %v2266 = vadd.f32 0.0, %v2265
        %2267 = vmatmul.bf16.gmra.mxu0 %v2227
        %v2268 = vpop.f32.mrf.mxu0
        %v2269 = vadd.f32 0.0, %v2268
        %v2270 = vpop.f32.mrf.mxu0
        %v2271 = vadd.f32 0.0, %v2270
        %2272 = vmatmul.bf16.gmra.mxu0 %v2230
        %v2273 = vpop.f32.mrf.mxu0
        %v2274 = vadd.f32 0.0, %v2273
        %v2275 = vpop.f32.mrf.mxu0
        %v2276 = vadd.f32 0.0, %v2275
        %2277 = vmatmul.bf16.gmra.mxu0 %v2233
        %v2278 = vpop.f32.mrf.mxu0
        %v2279 = vadd.f32 0.0, %v2278
        %v2280 = vpop.f32.mrf.mxu0
        %v2281 = vadd.f32 0.0, %v2280
        %2282 = vmatmul.bf16.gmra.mxu0 %v2236
        %v2283 = vpop.f32.mrf.mxu0
        %v2284 = vadd.f32 0.0, %v2283
        %v2285 = vpop.f32.mrf.mxu0
        %v2286 = vadd.f32 0.0, %v2285
        %2287 = vmatmul.bf16.gmra.mxu0 %v2239
        %v2288 = vpop.f32.mrf.mxu0
        %v2289 = vadd.f32 0.0, %v2288
        %v2290 = vpop.f32.mrf.mxu0
        %v2291 = vadd.f32 0.0, %v2290
        %2292 = vmatmul.bf16.gmra.mxu0 %v2242
        %v2293 = vpop.f32.mrf.mxu0
        %v2294 = vadd.f32 0.0, %v2293
        %v2295 = vpop.f32.mrf.mxu0
        %v2296 = vadd.f32 0.0, %v2295
        %2297 = vmatmul.bf16.gmra.mxu0 %v2245
        %v2298 = vpop.f32.mrf.mxu0
        %v2299 = vadd.f32 0.0, %v2298
        %v2300 = vpop.f32.mrf.mxu0
        %v2301 = vadd.f32 0.0, %v2300
        %2302 = vmatmul.bf16.gmra.mxu0 %v2248
        %v2303 = vpop.f32.mrf.mxu0
        %v2304 = vadd.f32 0.0, %v2303
        %v2305 = vpop.f32.mrf.mxu0
        %v2306 = vadd.f32 0.0, %v2305
        %2307 = vdwg.mxu0
        %v2308 = vstv %s236
        %v2309 = vmul.f32 %v2308, %v2264
        %v2310 = vmul.f32 %v2308, %v2266
        %v2311 = vmul.f32 %v2308, %v2269
        %v2312 = vmul.f32 %v2308, %v2271
        %v2313 = vmul.f32 %v2308, %v2274
        %v2314 = vmul.f32 %v2308, %v2276
        %v2315 = vmul.f32 %v2308, %v2279
        %v2316 = vmul.f32 %v2308, %v2281
        %v2317 = vmul.f32 %v2308, %v2284
        %v2318 = vmul.f32 %v2308, %v2286
        %v2319 = vmul.f32 %v2308, %v2289
        %v2320 = vmul.f32 %v2308, %v2291
        %v2321 = vmul.f32 %v2308, %v2294
        %v2322 = vmul.f32 %v2308, %v2296
        %v2323 = vmul.f32 %v2308, %v2299
        %v2324 = vmul.f32 %v2308, %v2301
        %v2325 = vmul.f32 %v2308, %v2304
        %v2326 = vmul.f32 %v2308, %v2306
        %v2327 = vld [vmem:[%s3] sm:$0x1]
        %v2329 = vperm.slane %v2327, 0
        %v2331 = vadd.f32 %v2309, %v2329
        %v2332 = vadd.f32 %v2310, %v2329
        %v2333 = vadd.f32 %v2311, %v2329
        %v2334 = vadd.f32 %v2312, %v2329
        %v2335 = vadd.f32 %v2313, %v2329
        %v2336 = vadd.f32 %v2314, %v2329
        %v2337 = vadd.f32 %v2315, %v2329
        %v2338 = vadd.f32 %v2316, %v2329
        %v2339 = vadd.f32 %v2317, %v2329
        %v2340 = vadd.f32 %v2318, %v2329
        %v2341 = vadd.f32 %v2319, %v2329
        %v2342 = vadd.f32 %v2320, %v2329
        %v2343 = vadd.f32 %v2321, %v2329
        %v2344 = vadd.f32 %v2322, %v2329
        %v2345 = vadd.f32 %v2323, %v2329
        %v2346 = vadd.f32 %v2324, %v2329
        %v2347 = vadd.f32 %v2325, %v2329
        %v2348 = vadd.f32 %v2326, %v2329
        %v2349 = vmax.f32 %v2331, 0.0
        %v2350 = vmax.f32 %v2332, 0.0
        %v2351 = vmax.f32 %v2333, 0.0
        %v2352 = vmax.f32 %v2334, 0.0
        %v2353 = vmax.f32 %v2335, 0.0
        %v2354 = vmax.f32 %v2336, 0.0
        %v2355 = vmax.f32 %v2337, 0.0
        %v2356 = vmax.f32 %v2338, 0.0
        %v2357 = vmax.f32 %v2339, 0.0
        %v2358 = vmax.f32 %v2340, 0.0
        %v2359 = vmax.f32 %v2341, 0.0
        %v2360 = vmax.f32 %v2342, 0.0
        %v2361 = vmax.f32 %v2343, 0.0
        %v2362 = vmax.f32 %v2344, 0.0
        %v2363 = vmax.f32 %v2345, 0.0
        %v2364 = vmax.f32 %v2346, 0.0
        %v2365 = vmax.f32 %v2347, 0.0
        %v2366 = vmax.f32 %v2348, 0.0
        %vm2367 = vcmask 64512
        %2368 = vst.msk [vmem:[%s233] sm:$0xff] %vm2367, %v2349
        %2369 = vst.msk [vmem:[%s233 + $0x8] sm:$0xff] %vm2367, %v2350
        %2370 = vst.msk [vmem:[%s233 + $0x10] sm:$0xff] %vm2367, %v2351
        %2371 = vst.msk [vmem:[%s233 + $0x18] sm:$0xff] %vm2367, %v2352
        %2372 = vst.msk [vmem:[%s233 + $0x20] sm:$0xff] %vm2367, %v2353
        %2373 = vst.msk [vmem:[%s233 + $0x28] sm:$0xff] %vm2367, %v2354
        %2374 = vst.msk [vmem:[%s233 + $0x30] sm:$0xff] %vm2367, %v2355
        %2375 = vst.msk [vmem:[%s233 + $0x38] sm:$0xff] %vm2367, %v2356
        %2376 = vst.msk [vmem:[%s233 + $0x40] sm:$0xff] %vm2367, %v2357
        %2377 = vst.msk [vmem:[%s233 + $0x48] sm:$0xff] %vm2367, %v2358
        %2378 = vst.msk [vmem:[%s233 + $0x50] sm:$0xff] %vm2367, %v2359
        %2379 = vst.msk [vmem:[%s233 + $0x58] sm:$0xff] %vm2367, %v2360
        %2380 = vst.msk [vmem:[%s233 + $0x60] sm:$0xff] %vm2367, %v2361
        %2381 = vst.msk [vmem:[%s233 + $0x68] sm:$0xff] %vm2367, %v2362
        %2382 = vst.msk [vmem:[%s233 + $0x70] sm:$0xff] %vm2367, %v2363
        %2383 = vst.msk [vmem:[%s233 + $0x78] sm:$0xff] %vm2367, %v2364
        %2384 = vst.msk [vmem:[%s233 + $0x80] sm:$0xff] %vm2367, %v2365
        %2385 = vst.msk [vmem:[%s233 + $0x88] sm:$0xff] %vm2367, %v2366
        %s2386 = smul.u32 18, %s21
        %p2387 = scmp.lt.s32.totalorder %s20, 1
        %s2388 = scalar_select %p2387, %s20, 1
        %p2389 = scmp.lt.s32.totalorder %s2386, 35
        %s2390 = scalar_select %p2389, %s2386, 35
        %s2391 = smul.addr %s2388, 36
        %s2392 = sadd.s32 %s2390, %s2391
        %s2393 = smul.addr %s2392, 8
        %s2394 = scalar_lea.vmem %s4, %s2393
        // Predicated region
        $region41: #{tpu_custom_call.1} parent=35 // pred_check
          %p2395 = pneg %p137
        $region42: #{tpu_custom_call.1} parent=35 // pred_check_branch
          %2397 = sbr.rel (%p2395) target = $region44
        $region43: #{tpu_custom_call.1} parent=35 // pred_region
          %s2398 = smul.u32 18, %s21
        $region44: #{tpu_custom_call.1} parent=35 // pred_fallthru
          _
      $region36: #{tpu_custom_call.1} parent=5 // pred_fallthru
        _
      %p2399 = scmp.le.s32.totalorder 2, %s11
      // Predicated region
      $region45: #{tpu_custom_call.1} parent=5 // pred_check
        %p2400 = pneg %p2399
      $region46: #{tpu_custom_call.1} parent=5 // pred_check_branch
        %2402 = sbr.rel (%p2400) target = $region48
      $region47: #{tpu_custom_call.1} parent=5 // pred_region
        %s2403 = ssub.s32 %s11, 2
        // Predicated region
        $region49: #{tpu_custom_call.1} parent=47 // pred_check
          %p2404 = pneg %p143
        $region50: #{tpu_custom_call.1} parent=47 // pred_check_branch
          %2406 = sbr.rel (%p2404) target = $region52
        $region51: #{tpu_custom_call.1} parent=47 // pred_region
          %s2407 = smul.u32 18, %s23
          %p2408 = scmp.lt.s32.totalorder %s22, 1
          %s2409 = scalar_select %p2408, %s22, 1
          %p2410 = scmp.lt.s32.totalorder %s2407, 35
          %s2411 = scalar_select %p2410, %s2407, 35
          %s2412 = smul.addr %s2409, 36
          %s2413 = sadd.s32 %s2411, %s2412
          %s2414 = smul.addr %s2413, 8
          %s2415 = scalar_lea.vmem %s4, %s2414
        $region52: #{tpu_custom_call.1} parent=47 // pred_fallthru
          _
      $region48: #{tpu_custom_call.1} parent=5 // pred_fallthru
        _
    $region6: #{tpu_custom_call.1} parent=1 // loop_footer
      %s15 = sadd.s32 1, %s11
    $region7: #{tpu_custom_call.1} parent=1 // loop_footer_branch
      %10 = sbr.rel target = $region3
    $region8: #{tpu_custom_call.1} parent=1 // loop_exit
      _
    %2416 = vsyncpa [#allocation5], 1
    %s2417 = scalar_lea.sflag [#allocation5], 1
    %2418 = vsyncpa %s2417, 1

</llo_original>
